<compile_context>
chip_gen: v5e
topology: v5e:2x2
jax: 0.10.0
libtpu: 0.0.40
codegen_flags: <defaults>
</compile_context>

<pallas_src>
import math
import jax
import jax.numpy as jnp
from jax.experimental import pallas as pl
from jax.experimental.pallas import tpu as pltpu

FRAME_SIZE = 32          # `frame_size` global in the original module (chosen here)
HIDDEN = 128
RNN_LAYERS = 4
LEAKY_SLOPE = 0.01       # PyTorch nn.LeakyReLU default
FUNNEL_DIMS = [HIDDEN, 64, 32, 16, 8, 4, 2, 1]   # 128->...->2 (+LeakyReLU), 2->1 (+Sigmoid)
N_FUNNEL = len(FUNNEL_DIMS) - 1
SUB = 8                  # sublane granule

# ---- RNN weight slab row offsets (lane dim = 128 everywhere) ----------------
_W_IH0_OFF = 0                                     # (FRAME_SIZE, 128)
_W_HH0_OFF = FRAME_SIZE                            # (128, 128)
_WCAT_BASE = FRAME_SIZE + HIDDEN                   # 3 x (256, 128) = [W_ih_l; W_hh_l]
_BIAS_OFF = _WCAT_BASE + (RNN_LAYERS - 1) * 2 * HIDDEN
_RNN_SLAB_ROWS = _BIAS_OFF + RNN_LAYERS * SUB      # biases replicated to 8 sublanes

# ---- Funnel weight slab: 7 zero-padded (128,128) blocks + one (8,128) bias block
_FUN_BIAS_OFF = N_FUNNEL * HIDDEN
_FUN_SLAB_ROWS = _FUN_BIAS_OFF + SUB


# -----------------------------------------------------------------------------
# Fused kernel: whole forward pass in one gridless invocation.
#   inputs : x_pad (seq*bp, F) bf16, rnn_slab (960,128) bf16,
#            fun_slab (904,128) bf16, h0 (L, bp, 128) f32
#   outputs: snare_slab (seq*bp, 128) f32, new_state (L, bp, 128) f32
#   scratch: top_slab (seq*bp, 128) f32   (top RNN layer outputs)
# -----------------------------------------------------------------------------
def fused_single_event_kernel(x_ref, rnn_ref, fun_ref, h0_ref,
                              snare_ref, state_ref, top_ref):
    f32, bf16 = jnp.float32, jnp.bfloat16
    bp = h0_ref.shape[1]               # padded batch (multiple of 8)
    seq = x_ref.shape[0] // bp

    # ---- weights: each slab slice loaded once (loops are Python-unrolled) ----
    w_ih0 = rnn_ref[_W_IH0_OFF:_W_IH0_OFF + FRAME_SIZE, :]          # (F,128) bf16
    w_hh0 = rnn_ref[_W_HH0_OFF:_W_HH0_OFF + HIDDEN, :]              # (128,128) bf16
    w_cat = [rnn_ref[_WCAT_BASE + j * 2 * HIDDEN:
                     _WCAT_BASE + (j + 1) * 2 * HIDDEN, :]          # (256,128) bf16
             for j in range(RNN_LAYERS - 1)]
    biases = [rnn_ref[_BIAS_OFF + l * SUB:_BIAS_OFF + (l + 1) * SUB, :].astype(f32)
              for l in range(RNN_LAYERS)]                           # (8,128) f32 each

    # ---- hoisted layer-0 input projection: one tall matmul for all timesteps -
    proj0 = jnp.dot(x_ref[...], w_ih0, preferred_element_type=f32)  # (seq*bp,128)

    # ---- wavefront recurrence: dependent chain = seq + L - 1 diagonals -------
    h = [h0_ref[l] for l in range(RNN_LAYERS)]                      # (bp,128) f32
    for s in range(seq + RNN_LAYERS - 1):
        updates = []
        for l in range(RNN_LAYERS):
            t = s - l
            if t < 0 or t >= seq:
                continue
            if l == 0:
                rec = jnp.dot(h[0].astype(bf16), w_hh0,
                              preferred_element_type=f32)
                pre = proj0[t * bp:(t + 1) * bp, :] + rec + biases[0]
            else:
                # Fused [input ; recurrent] projection: one 256-wide-K MXU pass.
                cat = jnp.concatenate([h[l - 1], h[l]], axis=1).astype(bf16)
                pre = jnp.dot(cat, w_cat[l - 1],
                              preferred_element_type=f32) + biases[l]
            updates.append((l, t, jnp.tanh(pre)))
        # Apply after computing the whole diagonal (reads used the s-1 snapshot).
        for l, t, v in updates:
            h[l] = v
            if l == RNN_LAYERS - 1:
                top_ref[t * bp:(t + 1) * bp, :] = v   # aligned (8,128) tile store
    for l in range(RNN_LAYERS):
        state_ref[l] = h[l]

    # ---- funnel MLP on the resident (seq*bp, 128) slab ------------------------
    # Every W is zero-padded to (128,128): no masked sub-128-lane intermediates;
    # dead lanes stay exactly 0 through LeakyReLU.
    fbias = fun_ref[_FUN_BIAS_OFF:_FUN_BIAS_OFF + SUB, :].astype(f32)   # (8,128)
    hf = top_ref[...]                                                   # (seq*bp,128) f32
    for i in range(N_FUNNEL):
        w = fun_ref[i * HIDDEN:(i + 1) * HIDDEN, :]                     # (128,128) bf16
        hf = jnp.dot(hf.astype(bf16), w, preferred_element_type=f32) + fbias[i]
        if i < N_FUNNEL - 1:
            hf = jnp.maximum(hf, LEAKY_SLOPE * hf)                      # LeakyReLU
        else:
            hf = 0.5 * (jnp.tanh(0.5 * hf) + 1.0)                       # stable sigmoid
    snare_ref[...] = hf


# -----------------------------------------------------------------------------
# Host-side weight packing into two bf16 slabs (2 weight DMAs instead of ~26).
# -----------------------------------------------------------------------------
def pack_rnn_slab(rnn_params):
    rows = [rnn_params[0][0], rnn_params[0][1]]            # W_ih0, W_hh0
    for l in range(1, RNN_LAYERS):
        rows += [rnn_params[l][0], rnn_params[l][1]]        # [W_ih_l ; W_hh_l]
    for l in range(RNN_LAYERS):
        rows.append(jnp.broadcast_to(rnn_params[l][2], (SUB, HIDDEN)))
    slab = jnp.concatenate(rows, axis=0).astype(jnp.bfloat16)
    assert slab.shape == (_RNN_SLAB_ROWS, HIDDEN)
    return slab


def pack_funnel_slab(funnel_params):
    blocks = []
    for w, _ in funnel_params:
        wp = jnp.zeros((HIDDEN, HIDDEN), jnp.float32)
        wp = wp.at[:w.shape[0], :w.shape[1]].set(w)
        blocks.append(wp)
    bias = jnp.zeros((SUB, HIDDEN), jnp.float32)
    for i, (_, b) in enumerate(funnel_params):
        bias = bias.at[i, :b.shape[1]].set(b[0])
    blocks.append(bias)
    slab = jnp.concatenate(blocks, axis=0).astype(jnp.bfloat16)
    assert slab.shape == (_FUN_SLAB_ROWS, HIDDEN)
    return slab


# -----------------------------------------------------------------------------
# Full forward: (is_snare, new_state), matching SingleEvent.forward semantics.
# -----------------------------------------------------------------------------
def single_event_forward(batch_inputs, rnn_slab, funnel_slab, state=None):
    seq, batch, in_dim = batch_inputs.shape
    bp = ((batch + SUB - 1) // SUB) * SUB                 # batch padded to 8 sublanes

    state_pad = jnp.zeros((RNN_LAYERS, bp, HIDDEN), jnp.float32)
    if state is not None:
        state_pad = state_pad.at[:, :batch, :].set(state)

    x_pad = jnp.zeros((seq, bp, in_dim), jnp.float32).at[:, :batch, :].set(batch_inputs)
    x_pad = x_pad.reshape(seq * bp, in_dim).astype(jnp.bfloat16)

    vmem = pl.BlockSpec(memory_space=pltpu.MemorySpace.VMEM)
    snare_slab, new_state_pad = pl.pallas_call(
        fused_single_event_kernel,
        out_shape=(
            jax.ShapeDtypeStruct((seq * bp, HIDDEN), jnp.float32),
            jax.ShapeDtypeStruct((RNN_LAYERS, bp, HIDDEN), jnp.float32),
        ),
        in_specs=[vmem, vmem, vmem, vmem],
        out_specs=(vmem, vmem),
        scratch_shapes=[pltpu.VMEM((seq * bp, HIDDEN), jnp.float32)],
        input_output_aliases={3: 1},                      # state buffer reused for new_state
    )(x_pad, rnn_slab, funnel_slab, state_pad)

    is_snare = snare_slab.reshape(seq, bp, HIDDEN)[:, :batch, 0:1]
    new_state = new_state_pad[:, :batch, :]
    return is_snare, new_state


# -----------------------------------------------------------------------------
# Deterministic parameter init (PyTorch-style uniform ranges) + pure-JAX ref.
# -----------------------------------------------------------------------------
def init_params(key):
    rnn_params = []
    stdv = 1.0 / math.sqrt(HIDDEN)
    for l in range(RNN_LAYERS):
        in_dim = FRAME_SIZE if l == 0 else HIDDEN
        key, k1, k2, k3, k4 = jax.random.split(key, 5)
        w_ih = jax.random.uniform(k1, (in_dim, HIDDEN), jnp.float32, -stdv, stdv)
        w_hh = jax.random.uniform(k2, (HIDDEN, HIDDEN), jnp.float32, -stdv, stdv)
        b_ih = jax.random.uniform(k3, (HIDDEN,), jnp.float32, -stdv, stdv)
        b_hh = jax.random.uniform(k4, (HIDDEN,), jnp.float32, -stdv, stdv)
        rnn_params.append((w_ih, w_hh, (b_ih + b_hh).reshape(1, HIDDEN)))

    funnel_params = []
    for i in range(N_FUNNEL):
        key, k1, k2 = jax.random.split(key, 3)
        s = 1.0 / math.sqrt(FUNNEL_DIMS[i])
        w = jax.random.uniform(k1, (FUNNEL_DIMS[i], FUNNEL_DIMS[i + 1]), jnp.float32, -s, s)
        b = jax.random.uniform(k2, (1, FUNNEL_DIMS[i + 1]), jnp.float32, -s, s)
        funnel_params.append((w, b))
    return rnn_params, funnel_params


def reference_forward(batch_inputs, rnn_params, funnel_params, state=None):
    seq, batch, _ = batch_inputs.shape
    if state is None:
        state = jnp.zeros((RNN_LAYERS, batch, HIDDEN), jnp.float32)
    h_in = batch_inputs
    new_states = []
    hi = jax.lax.Precision.HIGHEST
    for l, (w_ih, w_hh, b) in enumerate(rnn_params):
        h_prev = state[l]
        outs = []
        for t in range(seq):
            h_prev = jnp.tanh(
                jnp.dot(h_in[t], w_ih, precision=hi)
                + jnp.dot(h_prev, w_hh, precision=hi) + b)
            outs.append(h_prev)
        h_in = jnp.stack(outs, 0)
        new_states.append(h_prev)
    new_state = jnp.stack(new_states, 0)
    h = h_in
    for i, (w, b) in enumerate(funnel_params):
        h = jnp.dot(h, w, precision=hi) + b
        h = jnp.where(h > 0, h, LEAKY_SLOPE * h) if i < N_FUNNEL - 1 else jax.nn.sigmoid(h)
    return h, new_state


if __name__ == "__main__":
    seq_len, batch = 8, 2
    key = jax.random.PRNGKey(0)
    key, kx = jax.random.split(key)
    batch_inputs = jax.random.normal(kx, (seq_len, batch, FRAME_SIZE), jnp.float32)

    rnn_params, funnel_params = init_params(jax.random.PRNGKey(0))
    rnn_slab = pack_rnn_slab(rnn_params)
    funnel_slab = pack_funnel_slab(funnel_params)

    fwd = jax.jit(single_event_forward)
    is_snare, new_state = fwd(batch_inputs, rnn_slab, funnel_slab)
    is_snare.block_until_ready()
    new_state.block_until_ready()

    ref_snare, ref_state = reference_forward(batch_inputs, rnn_params, funnel_params)

    assert is_snare.shape == (seq_len, batch, 1)
    assert new_state.shape == (RNN_LAYERS, batch, HIDDEN)
    assert jnp.allclose(is_snare, ref_snare, rtol=2e-2, atol=2e-2)
    assert jnp.allclose(new_state, ref_state, rtol=2e-2, atol=2e-2)

    print("KERNEL_OK")
</pallas_src>

<mosaic_0001>
module attributes {stable_mosaic.version = 11 : i64} {
  func.func @fused_single_event_kernel(%arg0: memref<64x32xbf16, #tpu.memory_space<vmem>>, %arg1: memref<960x128xbf16, #tpu.memory_space<vmem>>, %arg2: memref<904x128xbf16, #tpu.memory_space<vmem>>, %arg3: memref<4x8x128xf32, #tpu.memory_space<vmem>>, %arg4: memref<64x128xf32, #tpu.memory_space<vmem>>, %arg5: memref<4x8x128xf32, #tpu.memory_space<vmem>>, %arg6: memref<64x128xf32, #tpu.memory_space<vmem>>) attributes {dimension_semantics = [], scalar_prefetch = 0 : i64, scratch_operands = 1 : i64, tpu.core_type = #tpu.core_type<tc>} {
    %c0 = arith.constant 0 : index
    %c0_0 = arith.constant 0 : index
    %0 = vector.load %arg1[%c0, %c0_0] : memref<960x128xbf16, #tpu.memory_space<vmem>>, vector<32x128xbf16>
    %c32 = arith.constant 32 : index
    %c0_1 = arith.constant 0 : index
    %1 = vector.load %arg1[%c32, %c0_1] : memref<960x128xbf16, #tpu.memory_space<vmem>>, vector<128x128xbf16>
    %c160 = arith.constant 160 : index
    %c0_2 = arith.constant 0 : index
    %2 = vector.load %arg1[%c160, %c0_2] : memref<960x128xbf16, #tpu.memory_space<vmem>>, vector<256x128xbf16>
    %c416 = arith.constant 416 : index
    %c0_3 = arith.constant 0 : index
    %3 = vector.load %arg1[%c416, %c0_3] : memref<960x128xbf16, #tpu.memory_space<vmem>>, vector<256x128xbf16>
    %c672 = arith.constant 672 : index
    %c0_4 = arith.constant 0 : index
    %4 = vector.load %arg1[%c672, %c0_4] : memref<960x128xbf16, #tpu.memory_space<vmem>>, vector<256x128xbf16>
    %c928 = arith.constant 928 : index
    %c0_5 = arith.constant 0 : index
    %5 = vector.load %arg1[%c928, %c0_5] : memref<960x128xbf16, #tpu.memory_space<vmem>>, vector<8x128xbf16>
    %6 = arith.extf %5 : vector<8x128xbf16> to vector<8x128xf32>
    %c936 = arith.constant 936 : index
    %c0_6 = arith.constant 0 : index
    %7 = vector.load %arg1[%c936, %c0_6] : memref<960x128xbf16, #tpu.memory_space<vmem>>, vector<8x128xbf16>
    %8 = arith.extf %7 : vector<8x128xbf16> to vector<8x128xf32>
    %c944 = arith.constant 944 : index
    %c0_7 = arith.constant 0 : index
    %9 = vector.load %arg1[%c944, %c0_7] : memref<960x128xbf16, #tpu.memory_space<vmem>>, vector<8x128xbf16>
    %10 = arith.extf %9 : vector<8x128xbf16> to vector<8x128xf32>
    %c952 = arith.constant 952 : index
    %c0_8 = arith.constant 0 : index
    %11 = vector.load %arg1[%c952, %c0_8] : memref<960x128xbf16, #tpu.memory_space<vmem>>, vector<8x128xbf16>
    %12 = arith.extf %11 : vector<8x128xbf16> to vector<8x128xf32>
    %c0_9 = arith.constant 0 : index
    %c0_10 = arith.constant 0 : index
    %13 = vector.load %arg0[%c0_9, %c0_10] : memref<64x32xbf16, #tpu.memory_space<vmem>>, vector<64x32xbf16>
    %cst = arith.constant dense<0.000000e+00> : vector<64x128xf32>
    %14 = tpu.matmul %13, %0, %cst {dimension_numbers = #tpu.dot_dimension_numbers<[1], [0], [0], [1], [0, 0, 1, 1], [], []>} : vector<64x32xbf16>, vector<32x128xbf16>, vector<64x128xf32> -> vector<64x128xf32>
    %c0_11 = arith.constant 0 : index
    %c0_12 = arith.constant 0 : index
    %c0_13 = arith.constant 0 : index
    %15 = vector.load %arg3[%c0_11, %c0_12, %c0_13] : memref<4x8x128xf32, #tpu.memory_space<vmem>>, vector<1x8x128xf32>
    %16 = vector.shape_cast %15 : vector<1x8x128xf32> to vector<8x128xf32>
    %c1 = arith.constant 1 : index
    %c0_14 = arith.constant 0 : index
    %c0_15 = arith.constant 0 : index
    %17 = vector.load %arg3[%c1, %c0_14, %c0_15] : memref<4x8x128xf32, #tpu.memory_space<vmem>>, vector<1x8x128xf32>
    %18 = vector.shape_cast %17 : vector<1x8x128xf32> to vector<8x128xf32>
    %c2 = arith.constant 2 : index
    %c0_16 = arith.constant 0 : index
    %c0_17 = arith.constant 0 : index
    %19 = vector.load %arg3[%c2, %c0_16, %c0_17] : memref<4x8x128xf32, #tpu.memory_space<vmem>>, vector<1x8x128xf32>
    %20 = vector.shape_cast %19 : vector<1x8x128xf32> to vector<8x128xf32>
    %c3 = arith.constant 3 : index
    %c0_18 = arith.constant 0 : index
    %c0_19 = arith.constant 0 : index
    %21 = vector.load %arg3[%c3, %c0_18, %c0_19] : memref<4x8x128xf32, #tpu.memory_space<vmem>>, vector<1x8x128xf32>
    %22 = vector.shape_cast %21 : vector<1x8x128xf32> to vector<8x128xf32>
    %23 = arith.truncf %16 : vector<8x128xf32> to vector<8x128xbf16>
    %cst_20 = arith.constant dense<0.000000e+00> : vector<8x128xf32>
    %24 = tpu.matmul %23, %1, %cst_20 {dimension_numbers = #tpu.dot_dimension_numbers<[1], [0], [0], [1], [0, 0, 1, 1], [], []>} : vector<8x128xbf16>, vector<128x128xbf16>, vector<8x128xf32> -> vector<8x128xf32>
    %25 = vector.extract_strided_slice %14 {offsets = [0, 0], sizes = [8, 128], strides = [1, 1]} : vector<64x128xf32> to vector<8x128xf32>
    %26 = arith.addf %25, %24 : vector<8x128xf32>
    %27 = arith.addf %26, %6 : vector<8x128xf32>
    %28 = math.tanh %27 : vector<8x128xf32>
    %29 = arith.truncf %28 : vector<8x128xf32> to vector<8x128xbf16>
    %cst_21 = arith.constant dense<0.000000e+00> : vector<8x128xf32>
    %30 = tpu.matmul %29, %1, %cst_21 {dimension_numbers = #tpu.dot_dimension_numbers<[1], [0], [0], [1], [0, 0, 1, 1], [], []>} : vector<8x128xbf16>, vector<128x128xbf16>, vector<8x128xf32> -> vector<8x128xf32>
    %31 = vector.extract_strided_slice %14 {offsets = [8, 0], sizes = [8, 128], strides = [1, 1]} : vector<64x128xf32> to vector<8x128xf32>
    %32 = arith.addf %31, %30 : vector<8x128xf32>
    %33 = arith.addf %32, %6 : vector<8x128xf32>
    %34 = math.tanh %33 : vector<8x128xf32>
    %35 = tpu.concatenate %28, %18 in 1 : vector<8x128xf32>, vector<8x128xf32> -> vector<8x256xf32>
    %36 = arith.truncf %35 : vector<8x256xf32> to vector<8x256xbf16>
    %cst_22 = arith.constant dense<0.000000e+00> : vector<8x128xf32>
    %37 = tpu.matmul %36, %2, %cst_22 {dimension_numbers = #tpu.dot_dimension_numbers<[1], [0], [0], [1], [0, 0, 1, 1], [], []>} : vector<8x256xbf16>, vector<256x128xbf16>, vector<8x128xf32> -> vector<8x128xf32>
    %38 = arith.addf %37, %8 : vector<8x128xf32>
    %39 = math.tanh %38 : vector<8x128xf32>
    %40 = arith.truncf %34 : vector<8x128xf32> to vector<8x128xbf16>
    %cst_23 = arith.constant dense<0.000000e+00> : vector<8x128xf32>
    %41 = tpu.matmul %40, %1, %cst_23 {dimension_numbers = #tpu.dot_dimension_numbers<[1], [0], [0], [1], [0, 0, 1, 1], [], []>} : vector<8x128xbf16>, vector<128x128xbf16>, vector<8x128xf32> -> vector<8x128xf32>
    %42 = vector.extract_strided_slice %14 {offsets = [16, 0], sizes = [8, 128], strides = [1, 1]} : vector<64x128xf32> to vector<8x128xf32>
    %43 = arith.addf %42, %41 : vector<8x128xf32>
    %44 = arith.addf %43, %6 : vector<8x128xf32>
    %45 = math.tanh %44 : vector<8x128xf32>
    %46 = tpu.concatenate %34, %39 in 1 : vector<8x128xf32>, vector<8x128xf32> -> vector<8x256xf32>
    %47 = arith.truncf %46 : vector<8x256xf32> to vector<8x256xbf16>
    %cst_24 = arith.constant dense<0.000000e+00> : vector<8x128xf32>
    %48 = tpu.matmul %47, %2, %cst_24 {dimension_numbers = #tpu.dot_dimension_numbers<[1], [0], [0], [1], [0, 0, 1, 1], [], []>} : vector<8x256xbf16>, vector<256x128xbf16>, vector<8x128xf32> -> vector<8x128xf32>
    %49 = arith.addf %48, %8 : vector<8x128xf32>
    %50 = math.tanh %49 : vector<8x128xf32>
    %51 = tpu.concatenate %39, %20 in 1 : vector<8x128xf32>, vector<8x128xf32> -> vector<8x256xf32>
    %52 = arith.truncf %51 : vector<8x256xf32> to vector<8x256xbf16>
    %cst_25 = arith.constant dense<0.000000e+00> : vector<8x128xf32>
    %53 = tpu.matmul %52, %3, %cst_25 {dimension_numbers = #tpu.dot_dimension_numbers<[1], [0], [0], [1], [0, 0, 1, 1], [], []>} : vector<8x256xbf16>, vector<256x128xbf16>, vector<8x128xf32> -> vector<8x128xf32>
    %54 = arith.addf %53, %10 : vector<8x128xf32>
    %55 = math.tanh %54 : vector<8x128xf32>
    %56 = arith.truncf %45 : vector<8x128xf32> to vector<8x128xbf16>
    %cst_26 = arith.constant dense<0.000000e+00> : vector<8x128xf32>
    %57 = tpu.matmul %56, %1, %cst_26 {dimension_numbers = #tpu.dot_dimension_numbers<[1], [0], [0], [1], [0, 0, 1, 1], [], []>} : vector<8x128xbf16>, vector<128x128xbf16>, vector<8x128xf32> -> vector<8x128xf32>
    %58 = vector.extract_strided_slice %14 {offsets = [24, 0], sizes = [8, 128], strides = [1, 1]} : vector<64x128xf32> to vector<8x128xf32>
    %59 = arith.addf %58, %57 : vector<8x128xf32>
    %60 = arith.addf %59, %6 : vector<8x128xf32>
    %61 = math.tanh %60 : vector<8x128xf32>
    %62 = tpu.concatenate %45, %50 in 1 : vector<8x128xf32>, vector<8x128xf32> -> vector<8x256xf32>
    %63 = arith.truncf %62 : vector<8x256xf32> to vector<8x256xbf16>
    %cst_27 = arith.constant dense<0.000000e+00> : vector<8x128xf32>
    %64 = tpu.matmul %63, %2, %cst_27 {dimension_numbers = #tpu.dot_dimension_numbers<[1], [0], [0], [1], [0, 0, 1, 1], [], []>} : vector<8x256xbf16>, vector<256x128xbf16>, vector<8x128xf32> -> vector<8x128xf32>
    %65 = arith.addf %64, %8 : vector<8x128xf32>
    %66 = math.tanh %65 : vector<8x128xf32>
    %67 = tpu.concatenate %50, %55 in 1 : vector<8x128xf32>, vector<8x128xf32> -> vector<8x256xf32>
    %68 = arith.truncf %67 : vector<8x256xf32> to vector<8x256xbf16>
    %cst_28 = arith.constant dense<0.000000e+00> : vector<8x128xf32>
    %69 = tpu.matmul %68, %3, %cst_28 {dimension_numbers = #tpu.dot_dimension_numbers<[1], [0], [0], [1], [0, 0, 1, 1], [], []>} : vector<8x256xbf16>, vector<256x128xbf16>, vector<8x128xf32> -> vector<8x128xf32>
    %70 = arith.addf %69, %10 : vector<8x128xf32>
    %71 = math.tanh %70 : vector<8x128xf32>
    %72 = tpu.concatenate %55, %22 in 1 : vector<8x128xf32>, vector<8x128xf32> -> vector<8x256xf32>
    %73 = arith.truncf %72 : vector<8x256xf32> to vector<8x256xbf16>
    %cst_29 = arith.constant dense<0.000000e+00> : vector<8x128xf32>
    %74 = tpu.matmul %73, %4, %cst_29 {dimension_numbers = #tpu.dot_dimension_numbers<[1], [0], [0], [1], [0, 0, 1, 1], [], []>} : vector<8x256xbf16>, vector<256x128xbf16>, vector<8x128xf32> -> vector<8x128xf32>
    %75 = arith.addf %74, %12 : vector<8x128xf32>
    %76 = math.tanh %75 : vector<8x128xf32>
    %c0_30 = arith.constant 0 : index
    %c0_31 = arith.constant 0 : index
    %77 = vector.load %arg6[%c0_30, %c0_31] : memref<64x128xf32, #tpu.memory_space<vmem>>, vector<8x128xf32>
    tpu.vector_store %arg6[%c0_30, %c0_31], %76 {strides = array<i32>} : memref<64x128xf32, #tpu.memory_space<vmem>>, vector<8x128xf32>,
    %78 = arith.truncf %61 : vector<8x128xf32> to vector<8x128xbf16>
    %cst_32 = arith.constant dense<0.000000e+00> : vector<8x128xf32>
    %79 = tpu.matmul %78, %1, %cst_32 {dimension_numbers = #tpu.dot_dimension_numbers<[1], [0], [0], [1], [0, 0, 1, 1], [], []>} : vector<8x128xbf16>, vector<128x128xbf16>, vector<8x128xf32> -> vector<8x128xf32>
    %80 = vector.extract_strided_slice %14 {offsets = [32, 0], sizes = [8, 128], strides = [1, 1]} : vector<64x128xf32> to vector<8x128xf32>
    %81 = arith.addf %80, %79 : vector<8x128xf32>
    %82 = arith.addf %81, %6 : vector<8x128xf32>
    %83 = math.tanh %82 : vector<8x128xf32>
    %84 = tpu.concatenate %61, %66 in 1 : vector<8x128xf32>, vector<8x128xf32> -> vector<8x256xf32>
    %85 = arith.truncf %84 : vector<8x256xf32> to vector<8x256xbf16>
    %cst_33 = arith.constant dense<0.000000e+00> : vector<8x128xf32>
    %86 = tpu.matmul %85, %2, %cst_33 {dimension_numbers = #tpu.dot_dimension_numbers<[1], [0], [0], [1], [0, 0, 1, 1], [], []>} : vector<8x256xbf16>, vector<256x128xbf16>, vector<8x128xf32> -> vector<8x128xf32>
    %87 = arith.addf %86, %8 : vector<8x128xf32>
    %88 = math.tanh %87 : vector<8x128xf32>
    %89 = tpu.concatenate %66, %71 in 1 : vector<8x128xf32>, vector<8x128xf32> -> vector<8x256xf32>
    %90 = arith.truncf %89 : vector<8x256xf32> to vector<8x256xbf16>
    %cst_34 = arith.constant dense<0.000000e+00> : vector<8x128xf32>
    %91 = tpu.matmul %90, %3, %cst_34 {dimension_numbers = #tpu.dot_dimension_numbers<[1], [0], [0], [1], [0, 0, 1, 1], [], []>} : vector<8x256xbf16>, vector<256x128xbf16>, vector<8x128xf32> -> vector<8x128xf32>
    %92 = arith.addf %91, %10 : vector<8x128xf32>
    %93 = math.tanh %92 : vector<8x128xf32>
    %94 = tpu.concatenate %71, %76 in 1 : vector<8x128xf32>, vector<8x128xf32> -> vector<8x256xf32>
    %95 = arith.truncf %94 : vector<8x256xf32> to vector<8x256xbf16>
    %cst_35 = arith.constant dense<0.000000e+00> : vector<8x128xf32>
    %96 = tpu.matmul %95, %4, %cst_35 {dimension_numbers = #tpu.dot_dimension_numbers<[1], [0], [0], [1], [0, 0, 1, 1], [], []>} : vector<8x256xbf16>, vector<256x128xbf16>, vector<8x128xf32> -> vector<8x128xf32>
    %97 = arith.addf %96, %12 : vector<8x128xf32>
    %98 = math.tanh %97 : vector<8x128xf32>
    %c8 = arith.constant 8 : index
    %c0_36 = arith.constant 0 : index
    %99 = vector.load %arg6[%c8, %c0_36] : memref<64x128xf32, #tpu.memory_space<vmem>>, vector<8x128xf32>
    tpu.vector_store %arg6[%c8, %c0_36], %98 {strides = array<i32>} : memref<64x128xf32, #tpu.memory_space<vmem>>, vector<8x128xf32>,
    %100 = arith.truncf %83 : vector<8x128xf32> to vector<8x128xbf16>
    %cst_37 = arith.constant dense<0.000000e+00> : vector<8x128xf32>
    %101 = tpu.matmul %100, %1, %cst_37 {dimension_numbers = #tpu.dot_dimension_numbers<[1], [0], [0], [1], [0, 0, 1, 1], [], []>} : vector<8x128xbf16>, vector<128x128xbf16>, vector<8x128xf32> -> vector<8x128xf32>
    %102 = vector.extract_strided_slice %14 {offsets = [40, 0], sizes = [8, 128], strides = [1, 1]} : vector<64x128xf32> to vector<8x128xf32>
    %103 = arith.addf %102, %101 : vector<8x128xf32>
    %104 = arith.addf %103, %6 : vector<8x128xf32>
    %105 = math.tanh %104 : vector<8x128xf32>
    %106 = tpu.concatenate %83, %88 in 1 : vector<8x128xf32>, vector<8x128xf32> -> vector<8x256xf32>
    %107 = arith.truncf %106 : vector<8x256xf32> to vector<8x256xbf16>
    %cst_38 = arith.constant dense<0.000000e+00> : vector<8x128xf32>
    %108 = tpu.matmul %107, %2, %cst_38 {dimension_numbers = #tpu.dot_dimension_numbers<[1], [0], [0], [1], [0, 0, 1, 1], [], []>} : vector<8x256xbf16>, vector<256x128xbf16>, vector<8x128xf32> -> vector<8x128xf32>
    %109 = arith.addf %108, %8 : vector<8x128xf32>
    %110 = math.tanh %109 : vector<8x128xf32>
    %111 = tpu.concatenate %88, %93 in 1 : vector<8x128xf32>, vector<8x128xf32> -> vector<8x256xf32>
    %112 = arith.truncf %111 : vector<8x256xf32> to vector<8x256xbf16>
    %cst_39 = arith.constant dense<0.000000e+00> : vector<8x128xf32>
    %113 = tpu.matmul %112, %3, %cst_39 {dimension_numbers = #tpu.dot_dimension_numbers<[1], [0], [0], [1], [0, 0, 1, 1], [], []>} : vector<8x256xbf16>, vector<256x128xbf16>, vector<8x128xf32> -> vector<8x128xf32>
    %114 = arith.addf %113, %10 : vector<8x128xf32>
    %115 = math.tanh %114 : vector<8x128xf32>
    %116 = tpu.concatenate %93, %98 in 1 : vector<8x128xf32>, vector<8x128xf32> -> vector<8x256xf32>
    %117 = arith.truncf %116 : vector<8x256xf32> to vector<8x256xbf16>
    %cst_40 = arith.constant dense<0.000000e+00> : vector<8x128xf32>
    %118 = tpu.matmul %117, %4, %cst_40 {dimension_numbers = #tpu.dot_dimension_numbers<[1], [0], [0], [1], [0, 0, 1, 1], [], []>} : vector<8x256xbf16>, vector<256x128xbf16>, vector<8x128xf32> -> vector<8x128xf32>
    %119 = arith.addf %118, %12 : vector<8x128xf32>
    %120 = math.tanh %119 : vector<8x128xf32>
    %c16 = arith.constant 16 : index
    %c0_41 = arith.constant 0 : index
    %121 = vector.load %arg6[%c16, %c0_41] : memref<64x128xf32, #tpu.memory_space<vmem>>, vector<8x128xf32>
    tpu.vector_store %arg6[%c16, %c0_41], %120 {strides = array<i32>} : memref<64x128xf32, #tpu.memory_space<vmem>>, vector<8x128xf32>,
    %122 = arith.truncf %105 : vector<8x128xf32> to vector<8x128xbf16>
    %cst_42 = arith.constant dense<0.000000e+00> : vector<8x128xf32>
    %123 = tpu.matmul %122, %1, %cst_42 {dimension_numbers = #tpu.dot_dimension_numbers<[1], [0], [0], [1], [0, 0, 1, 1], [], []>} : vector<8x128xbf16>, vector<128x128xbf16>, vector<8x128xf32> -> vector<8x128xf32>
    %124 = vector.extract_strided_slice %14 {offsets = [48, 0], sizes = [8, 128], strides = [1, 1]} : vector<64x128xf32> to vector<8x128xf32>
    %125 = arith.addf %124, %123 : vector<8x128xf32>
    %126 = arith.addf %125, %6 : vector<8x128xf32>
    %127 = math.tanh %126 : vector<8x128xf32>
    %128 = tpu.concatenate %105, %110 in 1 : vector<8x128xf32>, vector<8x128xf32> -> vector<8x256xf32>
    %129 = arith.truncf %128 : vector<8x256xf32> to vector<8x256xbf16>
    %cst_43 = arith.constant dense<0.000000e+00> : vector<8x128xf32>
    %130 = tpu.matmul %129, %2, %cst_43 {dimension_numbers = #tpu.dot_dimension_numbers<[1], [0], [0], [1], [0, 0, 1, 1], [], []>} : vector<8x256xbf16>, vector<256x128xbf16>, vector<8x128xf32> -> vector<8x128xf32>
    %131 = arith.addf %130, %8 : vector<8x128xf32>
    %132 = math.tanh %131 : vector<8x128xf32>
    %133 = tpu.concatenate %110, %115 in 1 : vector<8x128xf32>, vector<8x128xf32> -> vector<8x256xf32>
    %134 = arith.truncf %133 : vector<8x256xf32> to vector<8x256xbf16>
    %cst_44 = arith.constant dense<0.000000e+00> : vector<8x128xf32>
    %135 = tpu.matmul %134, %3, %cst_44 {dimension_numbers = #tpu.dot_dimension_numbers<[1], [0], [0], [1], [0, 0, 1, 1], [], []>} : vector<8x256xbf16>, vector<256x128xbf16>, vector<8x128xf32> -> vector<8x128xf32>
    %136 = arith.addf %135, %10 : vector<8x128xf32>
    %137 = math.tanh %136 : vector<8x128xf32>
    %138 = tpu.concatenate %115, %120 in 1 : vector<8x128xf32>, vector<8x128xf32> -> vector<8x256xf32>
    %139 = arith.truncf %138 : vector<8x256xf32> to vector<8x256xbf16>
    %cst_45 = arith.constant dense<0.000000e+00> : vector<8x128xf32>
    %140 = tpu.matmul %139, %4, %cst_45 {dimension_numbers = #tpu.dot_dimension_numbers<[1], [0], [0], [1], [0, 0, 1, 1], [], []>} : vector<8x256xbf16>, vector<256x128xbf16>, vector<8x128xf32> -> vector<8x128xf32>
    %141 = arith.addf %140, %12 : vector<8x128xf32>
    %142 = math.tanh %141 : vector<8x128xf32>
    %c24 = arith.constant 24 : index
    %c0_46 = arith.constant 0 : index
    %143 = vector.load %arg6[%c24, %c0_46] : memref<64x128xf32, #tpu.memory_space<vmem>>, vector<8x128xf32>
    tpu.vector_store %arg6[%c24, %c0_46], %142 {strides = array<i32>} : memref<64x128xf32, #tpu.memory_space<vmem>>, vector<8x128xf32>,
    %144 = arith.truncf %127 : vector<8x128xf32> to vector<8x128xbf16>
    %cst_47 = arith.constant dense<0.000000e+00> : vector<8x128xf32>
    %145 = tpu.matmul %144, %1, %cst_47 {dimension_numbers = #tpu.dot_dimension_numbers<[1], [0], [0], [1], [0, 0, 1, 1], [], []>} : vector<8x128xbf16>, vector<128x128xbf16>, vector<8x128xf32> -> vector<8x128xf32>
    %146 = vector.extract_strided_slice %14 {offsets = [56, 0], sizes = [8, 128], strides = [1, 1]} : vector<64x128xf32> to vector<8x128xf32>
    %147 = arith.addf %146, %145 : vector<8x128xf32>
    %148 = arith.addf %147, %6 : vector<8x128xf32>
    %149 = math.tanh %148 : vector<8x128xf32>
    %150 = tpu.concatenate %127, %132 in 1 : vector<8x128xf32>, vector<8x128xf32> -> vector<8x256xf32>
    %151 = arith.truncf %150 : vector<8x256xf32> to vector<8x256xbf16>
    %cst_48 = arith.constant dense<0.000000e+00> : vector<8x128xf32>
    %152 = tpu.matmul %151, %2, %cst_48 {dimension_numbers = #tpu.dot_dimension_numbers<[1], [0], [0], [1], [0, 0, 1, 1], [], []>} : vector<8x256xbf16>, vector<256x128xbf16>, vector<8x128xf32> -> vector<8x128xf32>
    %153 = arith.addf %152, %8 : vector<8x128xf32>
    %154 = math.tanh %153 : vector<8x128xf32>
    %155 = tpu.concatenate %132, %137 in 1 : vector<8x128xf32>, vector<8x128xf32> -> vector<8x256xf32>
    %156 = arith.truncf %155 : vector<8x256xf32> to vector<8x256xbf16>
    %cst_49 = arith.constant dense<0.000000e+00> : vector<8x128xf32>
    %157 = tpu.matmul %156, %3, %cst_49 {dimension_numbers = #tpu.dot_dimension_numbers<[1], [0], [0], [1], [0, 0, 1, 1], [], []>} : vector<8x256xbf16>, vector<256x128xbf16>, vector<8x128xf32> -> vector<8x128xf32>
    %158 = arith.addf %157, %10 : vector<8x128xf32>
    %159 = math.tanh %158 : vector<8x128xf32>
    %160 = tpu.concatenate %137, %142 in 1 : vector<8x128xf32>, vector<8x128xf32> -> vector<8x256xf32>
    %161 = arith.truncf %160 : vector<8x256xf32> to vector<8x256xbf16>
    %cst_50 = arith.constant dense<0.000000e+00> : vector<8x128xf32>
    %162 = tpu.matmul %161, %4, %cst_50 {dimension_numbers = #tpu.dot_dimension_numbers<[1], [0], [0], [1], [0, 0, 1, 1], [], []>} : vector<8x256xbf16>, vector<256x128xbf16>, vector<8x128xf32> -> vector<8x128xf32>
    %163 = arith.addf %162, %12 : vector<8x128xf32>
    %164 = math.tanh %163 : vector<8x128xf32>
    %c32_51 = arith.constant 32 : index
    %c0_52 = arith.constant 0 : index
    %165 = vector.load %arg6[%c32_51, %c0_52] : memref<64x128xf32, #tpu.memory_space<vmem>>, vector<8x128xf32>
    tpu.vector_store %arg6[%c32_51, %c0_52], %164 {strides = array<i32>} : memref<64x128xf32, #tpu.memory_space<vmem>>, vector<8x128xf32>,
    %166 = tpu.concatenate %149, %154 in 1 : vector<8x128xf32>, vector<8x128xf32> -> vector<8x256xf32>
    %167 = arith.truncf %166 : vector<8x256xf32> to vector<8x256xbf16>
    %cst_53 = arith.constant dense<0.000000e+00> : vector<8x128xf32>
    %168 = tpu.matmul %167, %2, %cst_53 {dimension_numbers = #tpu.dot_dimension_numbers<[1], [0], [0], [1], [0, 0, 1, 1], [], []>} : vector<8x256xbf16>, vector<256x128xbf16>, vector<8x128xf32> -> vector<8x128xf32>
    %169 = arith.addf %168, %8 : vector<8x128xf32>
    %170 = math.tanh %169 : vector<8x128xf32>
    %171 = tpu.concatenate %154, %159 in 1 : vector<8x128xf32>, vector<8x128xf32> -> vector<8x256xf32>
    %172 = arith.truncf %171 : vector<8x256xf32> to vector<8x256xbf16>
    %cst_54 = arith.constant dense<0.000000e+00> : vector<8x128xf32>
    %173 = tpu.matmul %172, %3, %cst_54 {dimension_numbers = #tpu.dot_dimension_numbers<[1], [0], [0], [1], [0, 0, 1, 1], [], []>} : vector<8x256xbf16>, vector<256x128xbf16>, vector<8x128xf32> -> vector<8x128xf32>
    %174 = arith.addf %173, %10 : vector<8x128xf32>
    %175 = math.tanh %174 : vector<8x128xf32>
    %176 = tpu.concatenate %159, %164 in 1 : vector<8x128xf32>, vector<8x128xf32> -> vector<8x256xf32>
    %177 = arith.truncf %176 : vector<8x256xf32> to vector<8x256xbf16>
    %cst_55 = arith.constant dense<0.000000e+00> : vector<8x128xf32>
    %178 = tpu.matmul %177, %4, %cst_55 {dimension_numbers = #tpu.dot_dimension_numbers<[1], [0], [0], [1], [0, 0, 1, 1], [], []>} : vector<8x256xbf16>, vector<256x128xbf16>, vector<8x128xf32> -> vector<8x128xf32>
    %179 = arith.addf %178, %12 : vector<8x128xf32>
    %180 = math.tanh %179 : vector<8x128xf32>
    %c40 = arith.constant 40 : index
    %c0_56 = arith.constant 0 : index
    %181 = vector.load %arg6[%c40, %c0_56] : memref<64x128xf32, #tpu.memory_space<vmem>>, vector<8x128xf32>
    tpu.vector_store %arg6[%c40, %c0_56], %180 {strides = array<i32>} : memref<64x128xf32, #tpu.memory_space<vmem>>, vector<8x128xf32>,
    %182 = tpu.concatenate %170, %175 in 1 : vector<8x128xf32>, vector<8x128xf32> -> vector<8x256xf32>
    %183 = arith.truncf %182 : vector<8x256xf32> to vector<8x256xbf16>
    %cst_57 = arith.constant dense<0.000000e+00> : vector<8x128xf32>
    %184 = tpu.matmul %183, %3, %cst_57 {dimension_numbers = #tpu.dot_dimension_numbers<[1], [0], [0], [1], [0, 0, 1, 1], [], []>} : vector<8x256xbf16>, vector<256x128xbf16>, vector<8x128xf32> -> vector<8x128xf32>
    %185 = arith.addf %184, %10 : vector<8x128xf32>
    %186 = math.tanh %185 : vector<8x128xf32>
    %187 = tpu.concatenate %175, %180 in 1 : vector<8x128xf32>, vector<8x128xf32> -> vector<8x256xf32>
    %188 = arith.truncf %187 : vector<8x256xf32> to vector<8x256xbf16>
    %cst_58 = arith.constant dense<0.000000e+00> : vector<8x128xf32>
    %189 = tpu.matmul %188, %4, %cst_58 {dimension_numbers = #tpu.dot_dimension_numbers<[1], [0], [0], [1], [0, 0, 1, 1], [], []>} : vector<8x256xbf16>, vector<256x128xbf16>, vector<8x128xf32> -> vector<8x128xf32>
    %190 = arith.addf %189, %12 : vector<8x128xf32>
    %191 = math.tanh %190 : vector<8x128xf32>
    %c48 = arith.constant 48 : index
    %c0_59 = arith.constant 0 : index
    %192 = vector.load %arg6[%c48, %c0_59] : memref<64x128xf32, #tpu.memory_space<vmem>>, vector<8x128xf32>
    tpu.vector_store %arg6[%c48, %c0_59], %191 {strides = array<i32>} : memref<64x128xf32, #tpu.memory_space<vmem>>, vector<8x128xf32>,
    %193 = tpu.concatenate %186, %191 in 1 : vector<8x128xf32>, vector<8x128xf32> -> vector<8x256xf32>
    %194 = arith.truncf %193 : vector<8x256xf32> to vector<8x256xbf16>
    %cst_60 = arith.constant dense<0.000000e+00> : vector<8x128xf32>
    %195 = tpu.matmul %194, %4, %cst_60 {dimension_numbers = #tpu.dot_dimension_numbers<[1], [0], [0], [1], [0, 0, 1, 1], [], []>} : vector<8x256xbf16>, vector<256x128xbf16>, vector<8x128xf32> -> vector<8x128xf32>
    %196 = arith.addf %195, %12 : vector<8x128xf32>
    %197 = math.tanh %196 : vector<8x128xf32>
    %c56 = arith.constant 56 : index
    %c0_61 = arith.constant 0 : index
    %198 = vector.load %arg6[%c56, %c0_61] : memref<64x128xf32, #tpu.memory_space<vmem>>, vector<8x128xf32>
    tpu.vector_store %arg6[%c56, %c0_61], %197 {strides = array<i32>} : memref<64x128xf32, #tpu.memory_space<vmem>>, vector<8x128xf32>,
    %c0_62 = arith.constant 0 : index
    %c0_63 = arith.constant 0 : index
    %c0_64 = arith.constant 0 : index
    %199 = vector.load %arg5[%c0_62, %c0_63, %c0_64] : memref<4x8x128xf32, #tpu.memory_space<vmem>>, vector<1x8x128xf32>
    %200 = vector.shape_cast %199 : vector<1x8x128xf32> to vector<8x128xf32>
    %201 = vector.shape_cast %149 : vector<8x128xf32> to vector<1x8x128xf32>
    tpu.vector_store %arg5[%c0_62, %c0_63, %c0_64], %201 {strides = array<i32>} : memref<4x8x128xf32, #tpu.memory_space<vmem>>, vector<1x8x128xf32>,
    %c1_65 = arith.constant 1 : index
    %c0_66 = arith.constant 0 : index
    %c0_67 = arith.constant 0 : index
    %202 = vector.load %arg5[%c1_65, %c0_66, %c0_67] : memref<4x8x128xf32, #tpu.memory_space<vmem>>, vector<1x8x128xf32>
    %203 = vector.shape_cast %202 : vector<1x8x128xf32> to vector<8x128xf32>
    %204 = vector.shape_cast %170 : vector<8x128xf32> to vector<1x8x128xf32>
    tpu.vector_store %arg5[%c1_65, %c0_66, %c0_67], %204 {strides = array<i32>} : memref<4x8x128xf32, #tpu.memory_space<vmem>>, vector<1x8x128xf32>,
    %c2_68 = arith.constant 2 : index
    %c0_69 = arith.constant 0 : index
    %c0_70 = arith.constant 0 : index
    %205 = vector.load %arg5[%c2_68, %c0_69, %c0_70] : memref<4x8x128xf32, #tpu.memory_space<vmem>>, vector<1x8x128xf32>
    %206 = vector.shape_cast %205 : vector<1x8x128xf32> to vector<8x128xf32>
    %207 = vector.shape_cast %186 : vector<8x128xf32> to vector<1x8x128xf32>
    tpu.vector_store %arg5[%c2_68, %c0_69, %c0_70], %207 {strides = array<i32>} : memref<4x8x128xf32, #tpu.memory_space<vmem>>, vector<1x8x128xf32>,
    %c3_71 = arith.constant 3 : index
    %c0_72 = arith.constant 0 : index
    %c0_73 = arith.constant 0 : index
    %208 = vector.load %arg5[%c3_71, %c0_72, %c0_73] : memref<4x8x128xf32, #tpu.memory_space<vmem>>, vector<1x8x128xf32>
    %209 = vector.shape_cast %208 : vector<1x8x128xf32> to vector<8x128xf32>
    %210 = vector.shape_cast %197 : vector<8x128xf32> to vector<1x8x128xf32>
    tpu.vector_store %arg5[%c3_71, %c0_72, %c0_73], %210 {strides = array<i32>} : memref<4x8x128xf32, #tpu.memory_space<vmem>>, vector<1x8x128xf32>,
    %c896 = arith.constant 896 : index
    %c0_74 = arith.constant 0 : index
    %211 = vector.load %arg2[%c896, %c0_74] : memref<904x128xbf16, #tpu.memory_space<vmem>>, vector<8x128xbf16>
    %212 = arith.extf %211 : vector<8x128xbf16> to vector<8x128xf32>
    %c0_75 = arith.constant 0 : index
    %c0_76 = arith.constant 0 : index
    %213 = vector.load %arg6[%c0_75, %c0_76] : memref<64x128xf32, #tpu.memory_space<vmem>>, vector<64x128xf32>
    %c0_77 = arith.constant 0 : index
    %c0_78 = arith.constant 0 : index
    %214 = vector.load %arg2[%c0_77, %c0_78] : memref<904x128xbf16, #tpu.memory_space<vmem>>, vector<128x128xbf16>
    %215 = arith.truncf %213 : vector<64x128xf32> to vector<64x128xbf16>
    %cst_79 = arith.constant dense<0.000000e+00> : vector<64x128xf32>
    %216 = tpu.matmul %215, %214, %cst_79 {dimension_numbers = #tpu.dot_dimension_numbers<[1], [0], [0], [1], [0, 0, 1, 1], [], []>} : vector<64x128xbf16>, vector<128x128xbf16>, vector<64x128xf32> -> vector<64x128xf32>
    %217 = vector.extract_strided_slice %212 {offsets = [0, 0], sizes = [1, 128], strides = [1, 1]} : vector<8x128xf32> to vector<1x128xf32>
    %218 = vector.shape_cast %217 : vector<1x128xf32> to vector<128xf32>
    %219 = vector.shape_cast %218 : vector<128xf32> to vector<1x128xf32>
    %220 = vector.broadcast %219 : vector<1x128xf32> to vector<64x128xf32>
    %221 = arith.addf %216, %220 : vector<64x128xf32>
    %cst_80 = arith.constant 0.00999999977 : f32
    %222 = vector.broadcast %cst_80 : f32 to vector<64x128xf32>
    %223 = arith.mulf %222, %221 : vector<64x128xf32>
    %224 = arith.maximumf %221, %223 : vector<64x128xf32>
    %c128 = arith.constant 128 : index
    %c0_81 = arith.constant 0 : index
    %225 = vector.load %arg2[%c128, %c0_81] : memref<904x128xbf16, #tpu.memory_space<vmem>>, vector<128x128xbf16>
    %226 = arith.truncf %224 : vector<64x128xf32> to vector<64x128xbf16>
    %cst_82 = arith.constant dense<0.000000e+00> : vector<64x128xf32>
    %227 = tpu.matmul %226, %225, %cst_82 {dimension_numbers = #tpu.dot_dimension_numbers<[1], [0], [0], [1], [0, 0, 1, 1], [], []>} : vector<64x128xbf16>, vector<128x128xbf16>, vector<64x128xf32> -> vector<64x128xf32>
    %228 = vector.extract_strided_slice %212 {offsets = [1, 0], sizes = [1, 128], strides = [1, 1]} : vector<8x128xf32> to vector<1x128xf32>
    %229 = vector.shape_cast %228 : vector<1x128xf32> to vector<128xf32>
    %230 = vector.shape_cast %229 : vector<128xf32> to vector<1x128xf32>
    %231 = vector.broadcast %230 : vector<1x128xf32> to vector<64x128xf32>
    %232 = arith.addf %227, %231 : vector<64x128xf32>
    %cst_83 = arith.constant 0.00999999977 : f32
    %233 = vector.broadcast %cst_83 : f32 to vector<64x128xf32>
    %234 = arith.mulf %233, %232 : vector<64x128xf32>
    %235 = arith.maximumf %232, %234 : vector<64x128xf32>
    %c256 = arith.constant 256 : index
    %c0_84 = arith.constant 0 : index
    %236 = vector.load %arg2[%c256, %c0_84] : memref<904x128xbf16, #tpu.memory_space<vmem>>, vector<128x128xbf16>
    %237 = arith.truncf %235 : vector<64x128xf32> to vector<64x128xbf16>
    %cst_85 = arith.constant dense<0.000000e+00> : vector<64x128xf32>
    %238 = tpu.matmul %237, %236, %cst_85 {dimension_numbers = #tpu.dot_dimension_numbers<[1], [0], [0], [1], [0, 0, 1, 1], [], []>} : vector<64x128xbf16>, vector<128x128xbf16>, vector<64x128xf32> -> vector<64x128xf32>
    %239 = vector.extract_strided_slice %212 {offsets = [2, 0], sizes = [1, 128], strides = [1, 1]} : vector<8x128xf32> to vector<1x128xf32>
    %240 = vector.shape_cast %239 : vector<1x128xf32> to vector<128xf32>
    %241 = vector.shape_cast %240 : vector<128xf32> to vector<1x128xf32>
    %242 = vector.broadcast %241 : vector<1x128xf32> to vector<64x128xf32>
    %243 = arith.addf %238, %242 : vector<64x128xf32>
    %cst_86 = arith.constant 0.00999999977 : f32
    %244 = vector.broadcast %cst_86 : f32 to vector<64x128xf32>
    %245 = arith.mulf %244, %243 : vector<64x128xf32>
    %246 = arith.maximumf %243, %245 : vector<64x128xf32>
    %c384 = arith.constant 384 : index
    %c0_87 = arith.constant 0 : index
    %247 = vector.load %arg2[%c384, %c0_87] : memref<904x128xbf16, #tpu.memory_space<vmem>>, vector<128x128xbf16>
    %248 = arith.truncf %246 : vector<64x128xf32> to vector<64x128xbf16>
    %cst_88 = arith.constant dense<0.000000e+00> : vector<64x128xf32>
    %249 = tpu.matmul %248, %247, %cst_88 {dimension_numbers = #tpu.dot_dimension_numbers<[1], [0], [0], [1], [0, 0, 1, 1], [], []>} : vector<64x128xbf16>, vector<128x128xbf16>, vector<64x128xf32> -> vector<64x128xf32>
    %250 = vector.extract_strided_slice %212 {offsets = [3, 0], sizes = [1, 128], strides = [1, 1]} : vector<8x128xf32> to vector<1x128xf32>
    %251 = vector.shape_cast %250 : vector<1x128xf32> to vector<128xf32>
    %252 = vector.shape_cast %251 : vector<128xf32> to vector<1x128xf32>
    %253 = vector.broadcast %252 : vector<1x128xf32> to vector<64x128xf32>
    %254 = arith.addf %249, %253 : vector<64x128xf32>
    %cst_89 = arith.constant 0.00999999977 : f32
    %255 = vector.broadcast %cst_89 : f32 to vector<64x128xf32>
    %256 = arith.mulf %255, %254 : vector<64x128xf32>
    %257 = arith.maximumf %254, %256 : vector<64x128xf32>
    %c512 = arith.constant 512 : index
    %c0_90 = arith.constant 0 : index
    %258 = vector.load %arg2[%c512, %c0_90] : memref<904x128xbf16, #tpu.memory_space<vmem>>, vector<128x128xbf16>
    %259 = arith.truncf %257 : vector<64x128xf32> to vector<64x128xbf16>
    %cst_91 = arith.constant dense<0.000000e+00> : vector<64x128xf32>
    %260 = tpu.matmul %259, %258, %cst_91 {dimension_numbers = #tpu.dot_dimension_numbers<[1], [0], [0], [1], [0, 0, 1, 1], [], []>} : vector<64x128xbf16>, vector<128x128xbf16>, vector<64x128xf32> -> vector<64x128xf32>
    %261 = vector.extract_strided_slice %212 {offsets = [4, 0], sizes = [1, 128], strides = [1, 1]} : vector<8x128xf32> to vector<1x128xf32>
    %262 = vector.shape_cast %261 : vector<1x128xf32> to vector<128xf32>
    %263 = vector.shape_cast %262 : vector<128xf32> to vector<1x128xf32>
    %264 = vector.broadcast %263 : vector<1x128xf32> to vector<64x128xf32>
    %265 = arith.addf %260, %264 : vector<64x128xf32>
    %cst_92 = arith.constant 0.00999999977 : f32
    %266 = vector.broadcast %cst_92 : f32 to vector<64x128xf32>
    %267 = arith.mulf %266, %265 : vector<64x128xf32>
    %268 = arith.maximumf %265, %267 : vector<64x128xf32>
    %c640 = arith.constant 640 : index
    %c0_93 = arith.constant 0 : index
    %269 = vector.load %arg2[%c640, %c0_93] : memref<904x128xbf16, #tpu.memory_space<vmem>>, vector<128x128xbf16>
    %270 = arith.truncf %268 : vector<64x128xf32> to vector<64x128xbf16>
    %cst_94 = arith.constant dense<0.000000e+00> : vector<64x128xf32>
    %271 = tpu.matmul %270, %269, %cst_94 {dimension_numbers = #tpu.dot_dimension_numbers<[1], [0], [0], [1], [0, 0, 1, 1], [], []>} : vector<64x128xbf16>, vector<128x128xbf16>, vector<64x128xf32> -> vector<64x128xf32>
    %272 = vector.extract_strided_slice %212 {offsets = [5, 0], sizes = [1, 128], strides = [1, 1]} : vector<8x128xf32> to vector<1x128xf32>
    %273 = vector.shape_cast %272 : vector<1x128xf32> to vector<128xf32>
    %274 = vector.shape_cast %273 : vector<128xf32> to vector<1x128xf32>
    %275 = vector.broadcast %274 : vector<1x128xf32> to vector<64x128xf32>
    %276 = arith.addf %271, %275 : vector<64x128xf32>
    %cst_95 = arith.constant 0.00999999977 : f32
    %277 = vector.broadcast %cst_95 : f32 to vector<64x128xf32>
    %278 = arith.mulf %277, %276 : vector<64x128xf32>
    %279 = arith.maximumf %276, %278 : vector<64x128xf32>
    %c768 = arith.constant 768 : index
    %c0_96 = arith.constant 0 : index
    %280 = vector.load %arg2[%c768, %c0_96] : memref<904x128xbf16, #tpu.memory_space<vmem>>, vector<128x128xbf16>
    %281 = arith.truncf %279 : vector<64x128xf32> to vector<64x128xbf16>
    %cst_97 = arith.constant dense<0.000000e+00> : vector<64x128xf32>
    %282 = tpu.matmul %281, %280, %cst_97 {dimension_numbers = #tpu.dot_dimension_numbers<[1], [0], [0], [1], [0, 0, 1, 1], [], []>} : vector<64x128xbf16>, vector<128x128xbf16>, vector<64x128xf32> -> vector<64x128xf32>
    %283 = vector.extract_strided_slice %212 {offsets = [6, 0], sizes = [1, 128], strides = [1, 1]} : vector<8x128xf32> to vector<1x128xf32>
    %284 = vector.shape_cast %283 : vector<1x128xf32> to vector<128xf32>
    %285 = vector.shape_cast %284 : vector<128xf32> to vector<1x128xf32>
    %286 = vector.broadcast %285 : vector<1x128xf32> to vector<64x128xf32>
    %287 = arith.addf %282, %286 : vector<64x128xf32>
    %cst_98 = arith.constant 5.000000e-01 : f32
    %288 = vector.broadcast %cst_98 : f32 to vector<64x128xf32>
    %289 = arith.mulf %288, %287 : vector<64x128xf32>
    %290 = math.tanh %289 : vector<64x128xf32>
    %cst_99 = arith.constant 1.000000e+00 : f32
    %291 = vector.broadcast %cst_99 : f32 to vector<64x128xf32>
    %292 = arith.addf %290, %291 : vector<64x128xf32>
    %cst_100 = arith.constant 5.000000e-01 : f32
    %293 = vector.broadcast %cst_100 : f32 to vector<64x128xf32>
    %294 = arith.mulf %293, %292 : vector<64x128xf32>
    %c0_101 = arith.constant 0 : index
    %c0_102 = arith.constant 0 : index
    %295 = vector.load %arg4[%c0_101, %c0_102] : memref<64x128xf32, #tpu.memory_space<vmem>>, vector<64x128xf32>
    tpu.vector_store %arg4[%c0_101, %c0_102], %294 {strides = array<i32>} : memref<64x128xf32, #tpu.memory_space<vmem>>, vector<64x128xf32>,
    return
  }
}

</mosaic_0001>

<llo_original>
// kernel: single_event_forward.1
$region0: #{single_event_forward.1}
  #allocation0 [shape = 'u32[]', space=smem, size = 0x4, offset = 0x4, fixed_abs, tag = 'smem constant byte address 0x4 - core index']
  #allocation1 [shape = 'u32[72,128]{1,0:T(1,128)}', space=vmem, size = 0x9000, scoped, tag = 'internal scratch']
  #allocation2 [shape = 'f32[64,128]{1,0:T(8,128)}', space=vmem, size = 0x8000, scoped, tag = 'scratch operand']
  %s0 = inlined_call_operand.vmem [shape: bf16[64,32], index: 0, kind: input, shape index: {}]
  %s1 = inlined_call_operand.hbm [shape: bf16[960,128], index: 1, kind: input, shape index: {}]
  %s2 = inlined_call_operand.hbm [shape: bf16[904,128], index: 2, kind: input, shape index: {}]
  %s3 = inlined_call_operand.vmem [shape: f32[4,8,128], index: 3, kind: input, shape index: {}, may-alias: {3,5}]
  %s4 = inlined_call_operand.vmem [shape: f32[64,128], index: 4, kind: output, shape index: {0}]
  %s5 = inlined_call_operand.vmem [shape: f32[4,8,128], index: 5, kind: output, shape index: {1}, may-alias: {3,5}]
  %6 = xla_tuple %s4, %s5
  %s7 = sld [smem:[#allocation0]]
  $region42: #{single_event_forward.1} parent=0
    _
  %s9 = ssub.s32 1, %s7
  %s10 = scalar_select 0, %s9, %s7
  $region1: #{single_event_forward.1} parent=0
    #allocation3 [shape = 'u8[245760]{0}', space=vmem, size = 0x3c000, scoped, tag = 'input window, operand 1, single buffered']
    #allocation4 [shape = 's32[1]{0}', space=sflag, size = 0x4, scoped, tag = 'scoped memory for single_event_forward.1']
    #allocation5 [shape = 'u8[231424]{0}', space=vmem, size = 0x38800, scoped, tag = 'input window, operand 2, single buffered']
    #allocation6 [shape = 's32[1]{0}', space=sflag, size = 0x4, scoped, tag = 'scoped memory for single_event_forward.1']
    %11 = vsyncpa [#allocation4], 0
    %12 = vsyncpa [#allocation6], 0
    // Predicated region
    $region2: #{single_event_forward.1} parent=1 // pred_check
      _
    $region3: #{single_event_forward.1} parent=1 // pred_check_branch
      %14 = sbr.rel (0) target = $region5
    $region4: #{single_event_forward.1} parent=1 // pred_region
      _
    $region5: #{single_event_forward.1} parent=1 // pred_fallthru
      _
    // Predicated region
    $region6: #{single_event_forward.1} parent=1 // pred_check
      _
    $region7: #{single_event_forward.1} parent=1 // pred_check_branch
      %16 = sbr.rel (0) target = $region9
    $region8: #{single_event_forward.1} parent=1 // pred_region
      %18 = vsyncadd [#allocation4], 0
      %s19 = sshll.u32 %s1, 4
      %s20 = int_to_ptr.hbm [resolvable:$true] %s19
      %s21 = sshll.u32 [#allocation3], 4
      %s22 = int_to_ptr.vmem [resolvable:$true] %s21
      %27 = dma.hbm_to_vmem [thread:$0]  %s20, 7680, %s22, [#allocation4], 64, 64, 4
    $region9: #{single_event_forward.1} parent=1 // pred_fallthru
      _
    // Predicated region
    $region10: #{single_event_forward.1} parent=1 // pred_check
      _
    $region11: #{single_event_forward.1} parent=1 // pred_check_branch
      %29 = sbr.rel (0) target = $region13
    $region12: #{single_event_forward.1} parent=1 // pred_region
      %31 = vsyncadd [#allocation6], 0
      %s32 = sshll.u32 %s2, 4
      %s33 = int_to_ptr.hbm [resolvable:$true] %s32
      %s34 = sshll.u32 [#allocation5], 4
      %s35 = int_to_ptr.vmem [resolvable:$true] %s34
      %40 = dma.hbm_to_vmem [thread:$0]  %s33, 7232, %s35, [#allocation6], 64, 64, 4
    $region13: #{single_event_forward.1} parent=1 // pred_fallthru
      _
    // Predicated region
    $region14: #{single_event_forward.1} parent=1 // pred_check
      _
    $region15: #{single_event_forward.1} parent=1 // pred_check_branch
      %42 = sbr.rel (0) target = $region17
    $region16: #{single_event_forward.1} parent=1 // pred_region
      _
    $region17: #{single_event_forward.1} parent=1 // pred_fallthru
      _
    // Predicated region
    $region18: #{single_event_forward.1} parent=1 // pred_check
      _
    $region19: #{single_event_forward.1} parent=1 // pred_check_branch
      %44 = sbr.rel (0) target = $region21
    $region20: #{single_event_forward.1} parent=1 // pred_region
      %46 = dma.done [#allocation4], 7680
    $region21: #{single_event_forward.1} parent=1 // pred_fallthru
      _
    // Predicated region
    $region22: #{single_event_forward.1} parent=1 // pred_check
      _
    $region23: #{single_event_forward.1} parent=1 // pred_check_branch
      %48 = sbr.rel (0) target = $region25
    $region24: #{single_event_forward.1} parent=1 // pred_region
      %50 = dma.done [#allocation6], 7232
    $region25: #{single_event_forward.1} parent=1 // pred_fallthru
      _
    %v52 = vld [vmem:[#allocation3] sm:$0xf]
    %v53 = vld [vmem:[#allocation3 + $0x4] sm:$0xf]
    %v54 = vld [vmem:[#allocation3 + $0x8] sm:$0xf]
    %v55 = vld [vmem:[#allocation3 + $0xc] sm:$0xf]
    %v56 = vld [vmem:[#allocation3 + $0x10] sm:$0xf]
    %v57 = vld [vmem:[#allocation3 + $0x14] sm:$0xf]
    %v58 = vld [vmem:[#allocation3 + $0x18] sm:$0xf]
    %v59 = vld [vmem:[#allocation3 + $0x1c] sm:$0xf]
    %v60 = vld [vmem:[#allocation3 + $0x20] sm:$0xf]
    %v61 = vld [vmem:[#allocation3 + $0x24] sm:$0xf]
    %v62 = vld [vmem:[#allocation3 + $0x28] sm:$0xf]
    %v63 = vld [vmem:[#allocation3 + $0x2c] sm:$0xf]
    %v64 = vld [vmem:[#allocation3 + $0x30] sm:$0xf]
    %v65 = vld [vmem:[#allocation3 + $0x34] sm:$0xf]
    %v66 = vld [vmem:[#allocation3 + $0x38] sm:$0xf]
    %v67 = vld [vmem:[#allocation3 + $0x3c] sm:$0xf]
    %v68 = vld [vmem:[#allocation3 + $0x40] sm:$0xf]
    %v69 = vld [vmem:[#allocation3 + $0x44] sm:$0xf]
    %v70 = vld [vmem:[#allocation3 + $0x48] sm:$0xf]
    %v71 = vld [vmem:[#allocation3 + $0x4c] sm:$0xf]
    %v72 = vld [vmem:[#allocation3 + $0x50] sm:$0xf]
    %v73 = vld [vmem:[#allocation3 + $0x54] sm:$0xf]
    %v74 = vld [vmem:[#allocation3 + $0x58] sm:$0xf]
    %v75 = vld [vmem:[#allocation3 + $0x5c] sm:$0xf]
    %v76 = vld [vmem:[#allocation3 + $0x60] sm:$0xf]
    %v77 = vld [vmem:[#allocation3 + $0x64] sm:$0xf]
    %v78 = vld [vmem:[#allocation3 + $0x68] sm:$0xf]
    %v79 = vld [vmem:[#allocation3 + $0x6c] sm:$0xf]
    %v80 = vld [vmem:[#allocation3 + $0x70] sm:$0xf]
    %v81 = vld [vmem:[#allocation3 + $0x74] sm:$0xf]
    %v82 = vld [vmem:[#allocation3 + $0x78] sm:$0xf]
    %v83 = vld [vmem:[#allocation3 + $0x7c] sm:$0xf]
    %v84 = vld [vmem:[#allocation3 + $0x80] sm:$0xf]
    %v85 = vld [vmem:[#allocation3 + $0x84] sm:$0xf]
    %v86 = vld [vmem:[#allocation3 + $0x88] sm:$0xf]
    %v87 = vld [vmem:[#allocation3 + $0x8c] sm:$0xf]
    %v88 = vld [vmem:[#allocation3 + $0x90] sm:$0xf]
    %v89 = vld [vmem:[#allocation3 + $0x94] sm:$0xf]
    %v90 = vld [vmem:[#allocation3 + $0x98] sm:$0xf]
    %v91 = vld [vmem:[#allocation3 + $0x9c] sm:$0xf]
    %v92 = vld [vmem:[#allocation3 + $0xa0] sm:$0xf]
    %v93 = vld [vmem:[#allocation3 + $0xa4] sm:$0xf]
    %v94 = vld [vmem:[#allocation3 + $0xa8] sm:$0xf]
    %v95 = vld [vmem:[#allocation3 + $0xac] sm:$0xf]
    %v96 = vld [vmem:[#allocation3 + $0xb0] sm:$0xf]
    %v97 = vld [vmem:[#allocation3 + $0xb4] sm:$0xf]
    %v98 = vld [vmem:[#allocation3 + $0xb8] sm:$0xf]
    %v99 = vld [vmem:[#allocation3 + $0xbc] sm:$0xf]
    %v100 = vld [vmem:[#allocation3 + $0xc0] sm:$0xf]
    %v101 = vld [vmem:[#allocation3 + $0xc4] sm:$0xf]
    %v102 = vld [vmem:[#allocation3 + $0xc8] sm:$0xf]
    %v103 = vld [vmem:[#allocation3 + $0xcc] sm:$0xf]
    %v104 = vld [vmem:[#allocation3 + $0xd0] sm:$0xf]
    %v105 = vld [vmem:[#allocation3 + $0xd4] sm:$0xf]
    %v106 = vld [vmem:[#allocation3 + $0xd8] sm:$0xf]
    %v107 = vld [vmem:[#allocation3 + $0xdc] sm:$0xf]
    %v108 = vld [vmem:[#allocation3 + $0xe0] sm:$0xf]
    %v109 = vld [vmem:[#allocation3 + $0xe4] sm:$0xf]
    %v110 = vld [vmem:[#allocation3 + $0xe8] sm:$0xf]
    %v111 = vld [vmem:[#allocation3 + $0xec] sm:$0xf]
    %v112 = vld [vmem:[#allocation3 + $0xf0] sm:$0xf]
    %v113 = vld [vmem:[#allocation3 + $0xf4] sm:$0xf]
    %v114 = vld [vmem:[#allocation3 + $0xf8] sm:$0xf]
    %v115 = vld [vmem:[#allocation3 + $0xfc] sm:$0xf]
    %v116 = vld [vmem:[#allocation3 + $0x100] sm:$0xf]
    %v117 = vld [vmem:[#allocation3 + $0x104] sm:$0xf]
    %v118 = vld [vmem:[#allocation3 + $0x108] sm:$0xf]
    %v119 = vld [vmem:[#allocation3 + $0x10c] sm:$0xf]
    %v120 = vld [vmem:[#allocation3 + $0x110] sm:$0xf]
    %v121 = vld [vmem:[#allocation3 + $0x114] sm:$0xf]
    %v122 = vld [vmem:[#allocation3 + $0x118] sm:$0xf]
    %v123 = vld [vmem:[#allocation3 + $0x11c] sm:$0xf]
    %v124 = vld [vmem:[#allocation3 + $0x120] sm:$0xf]
    %v125 = vld [vmem:[#allocation3 + $0x124] sm:$0xf]
    %v126 = vld [vmem:[#allocation3 + $0x128] sm:$0xf]
    %v127 = vld [vmem:[#allocation3 + $0x12c] sm:$0xf]
    %v128 = vld [vmem:[#allocation3 + $0x130] sm:$0xf]
    %v129 = vld [vmem:[#allocation3 + $0x134] sm:$0xf]
    %v130 = vld [vmem:[#allocation3 + $0x138] sm:$0xf]
    %v131 = vld [vmem:[#allocation3 + $0x13c] sm:$0xf]
    %v132 = vld [vmem:[#allocation3 + $0x140] sm:$0xf]
    %v133 = vld [vmem:[#allocation3 + $0x144] sm:$0xf]
    %v134 = vld [vmem:[#allocation3 + $0x148] sm:$0xf]
    %v135 = vld [vmem:[#allocation3 + $0x14c] sm:$0xf]
    %v136 = vld [vmem:[#allocation3 + $0x150] sm:$0xf]
    %v137 = vld [vmem:[#allocation3 + $0x154] sm:$0xf]
    %v138 = vld [vmem:[#allocation3 + $0x158] sm:$0xf]
    %v139 = vld [vmem:[#allocation3 + $0x15c] sm:$0xf]
    %v140 = vld [vmem:[#allocation3 + $0x160] sm:$0xf]
    %v141 = vld [vmem:[#allocation3 + $0x164] sm:$0xf]
    %v142 = vld [vmem:[#allocation3 + $0x168] sm:$0xf]
    %v143 = vld [vmem:[#allocation3 + $0x16c] sm:$0xf]
    %v144 = vld [vmem:[#allocation3 + $0x170] sm:$0xf]
    %v145 = vld [vmem:[#allocation3 + $0x174] sm:$0xf]
    %v146 = vld [vmem:[#allocation3 + $0x178] sm:$0xf]
    %v147 = vld [vmem:[#allocation3 + $0x17c] sm:$0xf]
    %v148 = vld [vmem:[#allocation3 + $0x180] sm:$0xf]
    %v149 = vld [vmem:[#allocation3 + $0x184] sm:$0xf]
    %v150 = vld [vmem:[#allocation3 + $0x188] sm:$0xf]
    %v151 = vld [vmem:[#allocation3 + $0x18c] sm:$0xf]
    %v152 = vld [vmem:[#allocation3 + $0x190] sm:$0xf]
    %v153 = vld [vmem:[#allocation3 + $0x194] sm:$0xf]
    %v154 = vld [vmem:[#allocation3 + $0x198] sm:$0xf]
    %v155 = vld [vmem:[#allocation3 + $0x19c] sm:$0xf]
    %v156 = vld [vmem:[#allocation3 + $0x1a0] sm:$0xf]
    %v157 = vld [vmem:[#allocation3 + $0x1a4] sm:$0xf]
    %v158 = vld [vmem:[#allocation3 + $0x1a8] sm:$0xf]
    %v159 = vld [vmem:[#allocation3 + $0x1ac] sm:$0xf]
    %v160 = vld [vmem:[#allocation3 + $0x1b0] sm:$0xf]
    %v161 = vld [vmem:[#allocation3 + $0x1b4] sm:$0xf]
    %v162 = vld [vmem:[#allocation3 + $0x1b8] sm:$0xf]
    %v163 = vld [vmem:[#allocation3 + $0x1bc] sm:$0xf]
    %v164 = vld [vmem:[#allocation3 + $0x1c0] sm:$0xf]
    %v165 = vld [vmem:[#allocation3 + $0x1c4] sm:$0xf]
    %v166 = vld [vmem:[#allocation3 + $0x1c8] sm:$0xf]
    %v167 = vld [vmem:[#allocation3 + $0x1cc] sm:$0xf]
    %v168 = vld [vmem:[#allocation3 + $0x1d0] sm:$0xf]
    %v169 = vunpack.c.l.bf16 %v168
    %v170 = vld [vmem:[#allocation3 + $0x1d4] sm:$0xf]
    %v171 = vunpack.c.l.bf16 %v170
    %v172 = vld [vmem:[#allocation3 + $0x1d8] sm:$0xf]
    %v173 = vunpack.c.l.bf16 %v172
    %v174 = vld [vmem:[#allocation3 + $0x1dc] sm:$0xf]
    %v175 = vunpack.c.l.bf16 %v174
    %v176 = vld [vmem:[%s0] sm:$0xf]
    %v177 = vld [vmem:[%s0 + $0x4] sm:$0xf]
    %v178 = vld [vmem:[%s0 + $0x8] sm:$0xf]
    %v179 = vld [vmem:[%s0 + $0xc] sm:$0xf]
    %v180 = vld [vmem:[%s0 + $0x10] sm:$0xf]
    %v181 = vld [vmem:[%s0 + $0x14] sm:$0xf]
    %v182 = vld [vmem:[%s0 + $0x18] sm:$0xf]
    %v183 = vld [vmem:[%s0 + $0x1c] sm:$0xf]
    %v192 = vunpack.c.l.b16 %v176
    %v193 = vunpack.c.l.b16 %v177
    %v194 = vunpack.c.l.b16 %v178
    %v195 = vunpack.c.l.b16 %v179
    %v196 = vunpack.c.l.b16 %v180
    %v197 = vunpack.c.l.b16 %v181
    %v198 = vunpack.c.l.b16 %v182
    %v199 = vunpack.c.l.b16 %v183
    %v200 = vpack.c.b16 %v193, %v192
    %v201 = vpack.c.b16 %v195, %v194
    %v202 = vpack.c.b16 %v197, %v196
    %v203 = vpack.c.b16 %v199, %v198
    %v208 = vunpack.c.l.b16 %v52
    %v209 = vunpack.c.l.b16 %v53
    %v210 = vunpack.c.l.b16 %v54
    %v211 = vunpack.c.l.b16 %v55
    %v212 = vpack.c.b16 %v209, %v208
    %v213 = vpack.c.b16 %v211, %v210
    %vm216 = vcmask 261120
    %v218 = vsel %vm216, %v200, 0
    %v221 = vsel %vm216, %v201, 0
    %v224 = vsel %vm216, %v202, 0
    %v227 = vsel %vm216, %v203, 0
    %229 = vmatpush.bf16.msra.mxu0 0
    %230 = vmatpush.bf16.msra.mxu0 0
    %231 = vmatpush.bf16.msra.mxu0 0
    %232 = vmatpush.bf16.msra.mxu0 0
    %233 = vmatpush.bf16.msra.mxu0 0
    %234 = vmatpush.bf16.msra.mxu0 0
    %235 = vmatpush.bf16.msra.mxu0 %v213
    %236 = vmatpush.bf16.msra.mxu0 %v212
    %237 = vmatmul.bf16.gmra.mxu0 %v218
    %v238 = vpop.f32.mrf.mxu0
    %v239 = vadd.f32 0.0, %v238
    %v240 = vpop.f32.mrf.mxu0
    %v241 = vadd.f32 0.0, %v240
    %242 = vmatmul.bf16.gmra.mxu0 %v221
    %v243 = vpop.f32.mrf.mxu0
    %v244 = vadd.f32 0.0, %v243
    %v245 = vpop.f32.mrf.mxu0
    %v246 = vadd.f32 0.0, %v245
    %247 = vmatmul.bf16.gmra.mxu0 %v224
    %v248 = vpop.f32.mrf.mxu0
    %v249 = vadd.f32 0.0, %v248
    %v250 = vpop.f32.mrf.mxu0
    %v251 = vadd.f32 0.0, %v250
    %252 = vmatmul.bf16.gmra.mxu0 %v227
    %v253 = vpop.f32.mrf.mxu0
    %v254 = vadd.f32 0.0, %v253
    %v255 = vpop.f32.mrf.mxu0
    %v256 = vadd.f32 0.0, %v255
    %257 = vdwg.mxu0
    %v258 = vld [vmem:[%s3] sm:$0xff]
    %s259 = scalar_lea.vmem %s3, 8
    %v260 = vld [vmem:[%s259] sm:$0xff]
    %s261 = scalar_lea.vmem %s3, 16
    %v262 = vld [vmem:[%s261] sm:$0xff]
    %s263 = scalar_lea.vmem %s3, 24
    %v264 = vld [vmem:[%s263] sm:$0xff]
    %v265 = vpack.c.bf16 %v258, %v258
    %v282 = vunpack.c.l.b16 %v56
    %v283 = vunpack.c.l.b16 %v57
    %v284 = vunpack.c.l.b16 %v58
    %v285 = vunpack.c.l.b16 %v59
    %v286 = vunpack.c.l.b16 %v60
    %v287 = vunpack.c.l.b16 %v61
    %v288 = vunpack.c.l.b16 %v62
    %v289 = vunpack.c.l.b16 %v63
    %v290 = vunpack.c.l.b16 %v64
    %v291 = vunpack.c.l.b16 %v65
    %v292 = vunpack.c.l.b16 %v66
    %v293 = vunpack.c.l.b16 %v67
    %v294 = vunpack.c.l.b16 %v68
    %v295 = vunpack.c.l.b16 %v69
    %v296 = vunpack.c.l.b16 %v70
    %v297 = vunpack.c.l.b16 %v71
    %v298 = vpack.c.b16 %v283, %v282
    %v299 = vpack.c.b16 %v285, %v284
    %v300 = vpack.c.b16 %v287, %v286
    %v301 = vpack.c.b16 %v289, %v288
    %v302 = vpack.c.b16 %v291, %v290
    %v303 = vpack.c.b16 %v293, %v292
    %v304 = vpack.c.b16 %v295, %v294
    %v305 = vpack.c.b16 %v297, %v296
    %314 = vmatpush.bf16.msra.mxu0 %v305
    %315 = vmatpush.bf16.msra.mxu0 %v304
    %316 = vmatpush.bf16.msra.mxu0 %v303
    %317 = vmatpush.bf16.msra.mxu0 %v302
    %318 = vmatpush.bf16.msra.mxu0 %v301
    %319 = vmatpush.bf16.msra.mxu0 %v300
    %320 = vmatpush.bf16.msra.mxu0 %v299
    %321 = vmatpush.bf16.msra.mxu0 %v298
    %322 = vmatmul.bf16.gmra.mxu0 %v265
    %v323 = vpop.f32.mrf.mxu0
    %v324 = vadd.f32 0.0, %v323
    %v325 = vpop.f32.mrf.mxu0
    %326 = vdwg.mxu0
    %v327 = vadd.f32 %v239, %v324
    %v328 = vadd.f32 %v327, %v169
    %v329 = vtanh.pop %v328
    %v330 = vpack.c.bf16 %v329, %v329
    %331 = vmatpush.bf16.msra.mxu0 %v305
    %332 = vmatpush.bf16.msra.mxu0 %v304
    %333 = vmatpush.bf16.msra.mxu0 %v303
    %334 = vmatpush.bf16.msra.mxu0 %v302
    %335 = vmatpush.bf16.msra.mxu0 %v301
    %336 = vmatpush.bf16.msra.mxu0 %v300
    %337 = vmatpush.bf16.msra.mxu0 %v299
    %338 = vmatpush.bf16.msra.mxu0 %v298
    %339 = vmatmul.bf16.gmra.mxu0 %v330
    %v340 = vpop.f32.mrf.mxu0
    %v341 = vadd.f32 0.0, %v340
    %v342 = vpop.f32.mrf.mxu0
    %343 = vdwg.mxu0
    %v344 = vadd.f32 %v241, %v341
    %v345 = vadd.f32 %v344, %v169
    %v346 = vtanh.pop %v345
    %v347 = vpack.c.bf16 %v260, %v260
    %v380 = vunpack.c.l.b16 %v72
    %v381 = vunpack.c.l.b16 %v73
    %v382 = vunpack.c.l.b16 %v74
    %v383 = vunpack.c.l.b16 %v75
    %v384 = vunpack.c.l.b16 %v76
    %v385 = vunpack.c.l.b16 %v77
    %v386 = vunpack.c.l.b16 %v78
    %v387 = vunpack.c.l.b16 %v79
    %v388 = vunpack.c.l.b16 %v80
    %v389 = vunpack.c.l.b16 %v81
    %v390 = vunpack.c.l.b16 %v82
    %v391 = vunpack.c.l.b16 %v83
    %v392 = vunpack.c.l.b16 %v84
    %v393 = vunpack.c.l.b16 %v85
    %v394 = vunpack.c.l.b16 %v86
    %v395 = vunpack.c.l.b16 %v87
    %v396 = vunpack.c.l.b16 %v88
    %v397 = vunpack.c.l.b16 %v89
    %v398 = vunpack.c.l.b16 %v90
    %v399 = vunpack.c.l.b16 %v91
    %v400 = vunpack.c.l.b16 %v92
    %v401 = vunpack.c.l.b16 %v93
    %v402 = vunpack.c.l.b16 %v94
    %v403 = vunpack.c.l.b16 %v95
    %v404 = vunpack.c.l.b16 %v96
    %v405 = vunpack.c.l.b16 %v97
    %v406 = vunpack.c.l.b16 %v98
    %v407 = vunpack.c.l.b16 %v99
    %v408 = vunpack.c.l.b16 %v100
    %v409 = vunpack.c.l.b16 %v101
    %v410 = vunpack.c.l.b16 %v102
    %v411 = vunpack.c.l.b16 %v103
    %v412 = vpack.c.b16 %v381, %v380
    %v413 = vpack.c.b16 %v383, %v382
    %v414 = vpack.c.b16 %v385, %v384
    %v415 = vpack.c.b16 %v387, %v386
    %v416 = vpack.c.b16 %v389, %v388
    %v417 = vpack.c.b16 %v391, %v390
    %v418 = vpack.c.b16 %v393, %v392
    %v419 = vpack.c.b16 %v395, %v394
    %v420 = vpack.c.b16 %v397, %v396
    %v421 = vpack.c.b16 %v399, %v398
    %v422 = vpack.c.b16 %v401, %v400
    %v423 = vpack.c.b16 %v403, %v402
    %v424 = vpack.c.b16 %v405, %v404
    %v425 = vpack.c.b16 %v407, %v406
    %v426 = vpack.c.b16 %v409, %v408
    %v427 = vpack.c.b16 %v411, %v410
    %444 = vmatpush.bf16.msra.mxu0 %v419
    %445 = vmatpush.bf16.msra.mxu0 %v418
    %446 = vmatpush.bf16.msra.mxu0 %v417
    %447 = vmatpush.bf16.msra.mxu0 %v416
    %448 = vmatpush.bf16.msra.mxu0 %v415
    %449 = vmatpush.bf16.msra.mxu0 %v414
    %450 = vmatpush.bf16.msra.mxu0 %v413
    %451 = vmatpush.bf16.msra.mxu0 %v412
    %452 = vmatmul.bf16.gmra.mxu0 %v330
    %v453 = vpop.f32.mrf.mxu0
    %v454 = vadd.f32 %v171, %v453
    %v455 = vpop.f32.mrf.mxu0
    %456 = vdwg.mxu0
    %457 = vmatpush.bf16.msra.mxu0 %v427
    %458 = vmatpush.bf16.msra.mxu0 %v426
    %459 = vmatpush.bf16.msra.mxu0 %v425
    %460 = vmatpush.bf16.msra.mxu0 %v424
    %461 = vmatpush.bf16.msra.mxu0 %v423
    %462 = vmatpush.bf16.msra.mxu0 %v422
    %463 = vmatpush.bf16.msra.mxu0 %v421
    %464 = vmatpush.bf16.msra.mxu0 %v420
    %465 = vmatmul.bf16.gmra.mxu0 %v347
    %v466 = vpop.f32.mrf.mxu0
    %v467 = vadd.f32 %v454, %v466
    %v468 = vpop.f32.mrf.mxu0
    %469 = vdwg.mxu0
    %v470 = vtanh.pop %v467
    %v471 = vpack.c.bf16 %v346, %v346
    %472 = vmatpush.bf16.msra.mxu0 %v305
    %473 = vmatpush.bf16.msra.mxu0 %v304
    %474 = vmatpush.bf16.msra.mxu0 %v303
    %475 = vmatpush.bf16.msra.mxu0 %v302
    %476 = vmatpush.bf16.msra.mxu0 %v301
    %477 = vmatpush.bf16.msra.mxu0 %v300
    %478 = vmatpush.bf16.msra.mxu0 %v299
    %479 = vmatpush.bf16.msra.mxu0 %v298
    %480 = vmatmul.bf16.gmra.mxu0 %v471
    %v481 = vpop.f32.mrf.mxu0
    %v482 = vadd.f32 0.0, %v481
    %v483 = vpop.f32.mrf.mxu0
    %484 = vdwg.mxu0
    %v485 = vadd.f32 %v244, %v482
    %v486 = vadd.f32 %v485, %v169
    %v487 = vtanh.pop %v486
    %v488 = vpack.c.bf16 %v470, %v470
    %489 = vmatpush.bf16.msra.mxu0 %v419
    %490 = vmatpush.bf16.msra.mxu0 %v418
    %491 = vmatpush.bf16.msra.mxu0 %v417
    %492 = vmatpush.bf16.msra.mxu0 %v416
    %493 = vmatpush.bf16.msra.mxu0 %v415
    %494 = vmatpush.bf16.msra.mxu0 %v414
    %495 = vmatpush.bf16.msra.mxu0 %v413
    %496 = vmatpush.bf16.msra.mxu0 %v412
    %497 = vmatmul.bf16.gmra.mxu0 %v471
    %v498 = vpop.f32.mrf.mxu0
    %v499 = vadd.f32 %v171, %v498
    %v500 = vpop.f32.mrf.mxu0
    %501 = vdwg.mxu0
    %502 = vmatpush.bf16.msra.mxu0 %v427
    %503 = vmatpush.bf16.msra.mxu0 %v426
    %504 = vmatpush.bf16.msra.mxu0 %v425
    %505 = vmatpush.bf16.msra.mxu0 %v424
    %506 = vmatpush.bf16.msra.mxu0 %v423
    %507 = vmatpush.bf16.msra.mxu0 %v422
    %508 = vmatpush.bf16.msra.mxu0 %v421
    %509 = vmatpush.bf16.msra.mxu0 %v420
    %510 = vmatmul.bf16.gmra.mxu0 %v488
    %v511 = vpop.f32.mrf.mxu0
    %v512 = vadd.f32 %v499, %v511
    %v513 = vpop.f32.mrf.mxu0
    %514 = vdwg.mxu0
    %v515 = vtanh.pop %v512
    %v516 = vpack.c.bf16 %v262, %v262
    %v549 = vunpack.c.l.b16 %v104
    %v550 = vunpack.c.l.b16 %v105
    %v551 = vunpack.c.l.b16 %v106
    %v552 = vunpack.c.l.b16 %v107
    %v553 = vunpack.c.l.b16 %v108
    %v554 = vunpack.c.l.b16 %v109
    %v555 = vunpack.c.l.b16 %v110
    %v556 = vunpack.c.l.b16 %v111
    %v557 = vunpack.c.l.b16 %v112
    %v558 = vunpack.c.l.b16 %v113
    %v559 = vunpack.c.l.b16 %v114
    %v560 = vunpack.c.l.b16 %v115
    %v561 = vunpack.c.l.b16 %v116
    %v562 = vunpack.c.l.b16 %v117
    %v563 = vunpack.c.l.b16 %v118
    %v564 = vunpack.c.l.b16 %v119
    %v565 = vunpack.c.l.b16 %v120
    %v566 = vunpack.c.l.b16 %v121
    %v567 = vunpack.c.l.b16 %v122
    %v568 = vunpack.c.l.b16 %v123
    %v569 = vunpack.c.l.b16 %v124
    %v570 = vunpack.c.l.b16 %v125
    %v571 = vunpack.c.l.b16 %v126
    %v572 = vunpack.c.l.b16 %v127
    %v573 = vunpack.c.l.b16 %v128
    %v574 = vunpack.c.l.b16 %v129
    %v575 = vunpack.c.l.b16 %v130
    %v576 = vunpack.c.l.b16 %v131
    %v577 = vunpack.c.l.b16 %v132
    %v578 = vunpack.c.l.b16 %v133
    %v579 = vunpack.c.l.b16 %v134
    %v580 = vunpack.c.l.b16 %v135
    %v581 = vpack.c.b16 %v550, %v549
    %v582 = vpack.c.b16 %v552, %v551
    %v583 = vpack.c.b16 %v554, %v553
    %v584 = vpack.c.b16 %v556, %v555
    %v585 = vpack.c.b16 %v558, %v557
    %v586 = vpack.c.b16 %v560, %v559
    %v587 = vpack.c.b16 %v562, %v561
    %v588 = vpack.c.b16 %v564, %v563
    %v589 = vpack.c.b16 %v566, %v565
    %v590 = vpack.c.b16 %v568, %v567
    %v591 = vpack.c.b16 %v570, %v569
    %v592 = vpack.c.b16 %v572, %v571
    %v593 = vpack.c.b16 %v574, %v573
    %v594 = vpack.c.b16 %v576, %v575
    %v595 = vpack.c.b16 %v578, %v577
    %v596 = vpack.c.b16 %v580, %v579
    %613 = vmatpush.bf16.msra.mxu0 %v588
    %614 = vmatpush.bf16.msra.mxu0 %v587
    %615 = vmatpush.bf16.msra.mxu0 %v586
    %616 = vmatpush.bf16.msra.mxu0 %v585
    %617 = vmatpush.bf16.msra.mxu0 %v584
    %618 = vmatpush.bf16.msra.mxu0 %v583
    %619 = vmatpush.bf16.msra.mxu0 %v582
    %620 = vmatpush.bf16.msra.mxu0 %v581
    %621 = vmatmul.bf16.gmra.mxu0 %v488
    %v622 = vpop.f32.mrf.mxu0
    %v623 = vadd.f32 %v173, %v622
    %v624 = vpop.f32.mrf.mxu0
    %625 = vdwg.mxu0
    %626 = vmatpush.bf16.msra.mxu0 %v596
    %627 = vmatpush.bf16.msra.mxu0 %v595
    %628 = vmatpush.bf16.msra.mxu0 %v594
    %629 = vmatpush.bf16.msra.mxu0 %v593
    %630 = vmatpush.bf16.msra.mxu0 %v592
    %631 = vmatpush.bf16.msra.mxu0 %v591
    %632 = vmatpush.bf16.msra.mxu0 %v590
    %633 = vmatpush.bf16.msra.mxu0 %v589
    %634 = vmatmul.bf16.gmra.mxu0 %v516
    %v635 = vpop.f32.mrf.mxu0
    %v636 = vadd.f32 %v623, %v635
    %v637 = vpop.f32.mrf.mxu0
    %638 = vdwg.mxu0
    %v639 = vtanh.pop %v636
    %v640 = vpack.c.bf16 %v487, %v487
    %641 = vmatpush.bf16.msra.mxu0 %v305
    %642 = vmatpush.bf16.msra.mxu0 %v304
    %643 = vmatpush.bf16.msra.mxu0 %v303
    %644 = vmatpush.bf16.msra.mxu0 %v302
    %645 = vmatpush.bf16.msra.mxu0 %v301
    %646 = vmatpush.bf16.msra.mxu0 %v300
    %647 = vmatpush.bf16.msra.mxu0 %v299
    %648 = vmatpush.bf16.msra.mxu0 %v298
    %649 = vmatmul.bf16.gmra.mxu0 %v640
    %v650 = vpop.f32.mrf.mxu0
    %v651 = vadd.f32 0.0, %v650
    %v652 = vpop.f32.mrf.mxu0
    %653 = vdwg.mxu0
    %v654 = vadd.f32 %v246, %v651
    %v655 = vadd.f32 %v654, %v169
    %v656 = vtanh.pop %v655
    %v657 = vpack.c.bf16 %v515, %v515
    %658 = vmatpush.bf16.msra.mxu0 %v419
    %659 = vmatpush.bf16.msra.mxu0 %v418
    %660 = vmatpush.bf16.msra.mxu0 %v417
    %661 = vmatpush.bf16.msra.mxu0 %v416
    %662 = vmatpush.bf16.msra.mxu0 %v415
    %663 = vmatpush.bf16.msra.mxu0 %v414
    %664 = vmatpush.bf16.msra.mxu0 %v413
    %665 = vmatpush.bf16.msra.mxu0 %v412
    %666 = vmatmul.bf16.gmra.mxu0 %v640
    %v667 = vpop.f32.mrf.mxu0
    %v668 = vadd.f32 %v171, %v667
    %v669 = vpop.f32.mrf.mxu0
    %670 = vdwg.mxu0
    %671 = vmatpush.bf16.msra.mxu0 %v427
    %672 = vmatpush.bf16.msra.mxu0 %v426
    %673 = vmatpush.bf16.msra.mxu0 %v425
    %674 = vmatpush.bf16.msra.mxu0 %v424
    %675 = vmatpush.bf16.msra.mxu0 %v423
    %676 = vmatpush.bf16.msra.mxu0 %v422
    %677 = vmatpush.bf16.msra.mxu0 %v421
    %678 = vmatpush.bf16.msra.mxu0 %v420
    %679 = vmatmul.bf16.gmra.mxu0 %v657
    %v680 = vpop.f32.mrf.mxu0
    %v681 = vadd.f32 %v668, %v680
    %v682 = vpop.f32.mrf.mxu0
    %683 = vdwg.mxu0
    %v684 = vtanh.pop %v681
    %v685 = vpack.c.bf16 %v639, %v639
    %686 = vmatpush.bf16.msra.mxu0 %v588
    %687 = vmatpush.bf16.msra.mxu0 %v587
    %688 = vmatpush.bf16.msra.mxu0 %v586
    %689 = vmatpush.bf16.msra.mxu0 %v585
    %690 = vmatpush.bf16.msra.mxu0 %v584
    %691 = vmatpush.bf16.msra.mxu0 %v583
    %692 = vmatpush.bf16.msra.mxu0 %v582
    %693 = vmatpush.bf16.msra.mxu0 %v581
    %694 = vmatmul.bf16.gmra.mxu0 %v657
    %v695 = vpop.f32.mrf.mxu0
    %v696 = vadd.f32 %v173, %v695
    %v697 = vpop.f32.mrf.mxu0
    %698 = vdwg.mxu0
    %699 = vmatpush.bf16.msra.mxu0 %v596
    %700 = vmatpush.bf16.msra.mxu0 %v595
    %701 = vmatpush.bf16.msra.mxu0 %v594
    %702 = vmatpush.bf16.msra.mxu0 %v593
    %703 = vmatpush.bf16.msra.mxu0 %v592
    %704 = vmatpush.bf16.msra.mxu0 %v591
    %705 = vmatpush.bf16.msra.mxu0 %v590
    %706 = vmatpush.bf16.msra.mxu0 %v589
    %707 = vmatmul.bf16.gmra.mxu0 %v685
    %v708 = vpop.f32.mrf.mxu0
    %v709 = vadd.f32 %v696, %v708
    %v710 = vpop.f32.mrf.mxu0
    %711 = vdwg.mxu0
    %v712 = vtanh.pop %v709
    %v713 = vpack.c.bf16 %v264, %v264
    %v746 = vunpack.c.l.b16 %v136
    %v747 = vunpack.c.l.b16 %v137
    %v748 = vunpack.c.l.b16 %v138
    %v749 = vunpack.c.l.b16 %v139
    %v750 = vunpack.c.l.b16 %v140
    %v751 = vunpack.c.l.b16 %v141
    %v752 = vunpack.c.l.b16 %v142
    %v753 = vunpack.c.l.b16 %v143
    %v754 = vunpack.c.l.b16 %v144
    %v755 = vunpack.c.l.b16 %v145
    %v756 = vunpack.c.l.b16 %v146
    %v757 = vunpack.c.l.b16 %v147
    %v758 = vunpack.c.l.b16 %v148
    %v759 = vunpack.c.l.b16 %v149
    %v760 = vunpack.c.l.b16 %v150
    %v761 = vunpack.c.l.b16 %v151
    %v762 = vunpack.c.l.b16 %v152
    %v763 = vunpack.c.l.b16 %v153
    %v764 = vunpack.c.l.b16 %v154
    %v765 = vunpack.c.l.b16 %v155
    %v766 = vunpack.c.l.b16 %v156
    %v767 = vunpack.c.l.b16 %v157
    %v768 = vunpack.c.l.b16 %v158
    %v769 = vunpack.c.l.b16 %v159
    %v770 = vunpack.c.l.b16 %v160
    %v771 = vunpack.c.l.b16 %v161
    %v772 = vunpack.c.l.b16 %v162
    %v773 = vunpack.c.l.b16 %v163
    %v774 = vunpack.c.l.b16 %v164
    %v775 = vunpack.c.l.b16 %v165
    %v776 = vunpack.c.l.b16 %v166
    %v777 = vunpack.c.l.b16 %v167
    %v778 = vpack.c.b16 %v747, %v746
    %v779 = vpack.c.b16 %v749, %v748
    %v780 = vpack.c.b16 %v751, %v750
    %v781 = vpack.c.b16 %v753, %v752
    %v782 = vpack.c.b16 %v755, %v754
    %v783 = vpack.c.b16 %v757, %v756
    %v784 = vpack.c.b16 %v759, %v758
    %v785 = vpack.c.b16 %v761, %v760
    %v786 = vpack.c.b16 %v763, %v762
    %v787 = vpack.c.b16 %v765, %v764
    %v788 = vpack.c.b16 %v767, %v766
    %v789 = vpack.c.b16 %v769, %v768
    %v790 = vpack.c.b16 %v771, %v770
    %v791 = vpack.c.b16 %v773, %v772
    %v792 = vpack.c.b16 %v775, %v774
    %v793 = vpack.c.b16 %v777, %v776
    %810 = vmatpush.bf16.msra.mxu0 %v785
    %811 = vmatpush.bf16.msra.mxu0 %v784
    %812 = vmatpush.bf16.msra.mxu0 %v783
    %813 = vmatpush.bf16.msra.mxu0 %v782
    %814 = vmatpush.bf16.msra.mxu0 %v781
    %815 = vmatpush.bf16.msra.mxu0 %v780
    %816 = vmatpush.bf16.msra.mxu0 %v779
    %817 = vmatpush.bf16.msra.mxu0 %v778
    %818 = vmatmul.bf16.gmra.mxu0 %v685
    %v819 = vpop.f32.mrf.mxu0
    %v820 = vadd.f32 %v175, %v819
    %v821 = vpop.f32.mrf.mxu0
    %822 = vdwg.mxu0
    %823 = vmatpush.bf16.msra.mxu0 %v793
    %824 = vmatpush.bf16.msra.mxu0 %v792
    %825 = vmatpush.bf16.msra.mxu0 %v791
    %826 = vmatpush.bf16.msra.mxu0 %v790
    %827 = vmatpush.bf16.msra.mxu0 %v789
    %828 = vmatpush.bf16.msra.mxu0 %v788
    %829 = vmatpush.bf16.msra.mxu0 %v787
    %830 = vmatpush.bf16.msra.mxu0 %v786
    %831 = vmatmul.bf16.gmra.mxu0 %v713
    %v832 = vpop.f32.mrf.mxu0
    %v833 = vadd.f32 %v820, %v832
    %v834 = vpop.f32.mrf.mxu0
    %835 = vdwg.mxu0
    %v836 = vtanh.pop %v833
    %837 = vst [vmem:[#allocation2] sm:$0xff] %v836
    %v838 = vpack.c.bf16 %v656, %v656
    %839 = vmatpush.bf16.msra.mxu0 %v305
    %840 = vmatpush.bf16.msra.mxu0 %v304
    %841 = vmatpush.bf16.msra.mxu0 %v303
    %842 = vmatpush.bf16.msra.mxu0 %v302
    %843 = vmatpush.bf16.msra.mxu0 %v301
    %844 = vmatpush.bf16.msra.mxu0 %v300
    %845 = vmatpush.bf16.msra.mxu0 %v299
    %846 = vmatpush.bf16.msra.mxu0 %v298
    %847 = vmatmul.bf16.gmra.mxu0 %v838
    %v848 = vpop.f32.mrf.mxu0
    %v849 = vadd.f32 0.0, %v848
    %v850 = vpop.f32.mrf.mxu0
    %851 = vdwg.mxu0
    %v852 = vadd.f32 %v249, %v849
    %v853 = vadd.f32 %v852, %v169
    %v854 = vtanh.pop %v853
    %v855 = vpack.c.bf16 %v684, %v684
    %856 = vmatpush.bf16.msra.mxu0 %v419
    %857 = vmatpush.bf16.msra.mxu0 %v418
    %858 = vmatpush.bf16.msra.mxu0 %v417
    %859 = vmatpush.bf16.msra.mxu0 %v416
    %860 = vmatpush.bf16.msra.mxu0 %v415
    %861 = vmatpush.bf16.msra.mxu0 %v414
    %862 = vmatpush.bf16.msra.mxu0 %v413
    %863 = vmatpush.bf16.msra.mxu0 %v412
    %864 = vmatmul.bf16.gmra.mxu0 %v838
    %v865 = vpop.f32.mrf.mxu0
    %v866 = vadd.f32 %v171, %v865
    %v867 = vpop.f32.mrf.mxu0
    %868 = vdwg.mxu0
    %869 = vmatpush.bf16.msra.mxu0 %v427
    %870 = vmatpush.bf16.msra.mxu0 %v426
    %871 = vmatpush.bf16.msra.mxu0 %v425
    %872 = vmatpush.bf16.msra.mxu0 %v424
    %873 = vmatpush.bf16.msra.mxu0 %v423
    %874 = vmatpush.bf16.msra.mxu0 %v422
    %875 = vmatpush.bf16.msra.mxu0 %v421
    %876 = vmatpush.bf16.msra.mxu0 %v420
    %877 = vmatmul.bf16.gmra.mxu0 %v855
    %v878 = vpop.f32.mrf.mxu0
    %v879 = vadd.f32 %v866, %v878
    %v880 = vpop.f32.mrf.mxu0
    %881 = vdwg.mxu0
    %v882 = vtanh.pop %v879
    %v883 = vpack.c.bf16 %v712, %v712
    %884 = vmatpush.bf16.msra.mxu0 %v588
    %885 = vmatpush.bf16.msra.mxu0 %v587
    %886 = vmatpush.bf16.msra.mxu0 %v586
    %887 = vmatpush.bf16.msra.mxu0 %v585
    %888 = vmatpush.bf16.msra.mxu0 %v584
    %889 = vmatpush.bf16.msra.mxu0 %v583
    %890 = vmatpush.bf16.msra.mxu0 %v582
    %891 = vmatpush.bf16.msra.mxu0 %v581
    %892 = vmatmul.bf16.gmra.mxu0 %v855
    %v893 = vpop.f32.mrf.mxu0
    %v894 = vadd.f32 %v173, %v893
    %v895 = vpop.f32.mrf.mxu0
    %896 = vdwg.mxu0
    %897 = vmatpush.bf16.msra.mxu0 %v596
    %898 = vmatpush.bf16.msra.mxu0 %v595
    %899 = vmatpush.bf16.msra.mxu0 %v594
    %900 = vmatpush.bf16.msra.mxu0 %v593
    %901 = vmatpush.bf16.msra.mxu0 %v592
    %902 = vmatpush.bf16.msra.mxu0 %v591
    %903 = vmatpush.bf16.msra.mxu0 %v590
    %904 = vmatpush.bf16.msra.mxu0 %v589
    %905 = vmatmul.bf16.gmra.mxu0 %v883
    %v906 = vpop.f32.mrf.mxu0
    %v907 = vadd.f32 %v894, %v906
    %v908 = vpop.f32.mrf.mxu0
    %909 = vdwg.mxu0
    %v910 = vtanh.pop %v907
    %v911 = vpack.c.bf16 %v836, %v836
    %912 = vmatpush.bf16.msra.mxu0 %v785
    %913 = vmatpush.bf16.msra.mxu0 %v784
    %914 = vmatpush.bf16.msra.mxu0 %v783
    %915 = vmatpush.bf16.msra.mxu0 %v782
    %916 = vmatpush.bf16.msra.mxu0 %v781
    %917 = vmatpush.bf16.msra.mxu0 %v780
    %918 = vmatpush.bf16.msra.mxu0 %v779
    %919 = vmatpush.bf16.msra.mxu0 %v778
    %920 = vmatmul.bf16.gmra.mxu0 %v883
    %v921 = vpop.f32.mrf.mxu0
    %v922 = vadd.f32 %v175, %v921
    %v923 = vpop.f32.mrf.mxu0
    %924 = vdwg.mxu0
    %925 = vmatpush.bf16.msra.mxu0 %v793
    %926 = vmatpush.bf16.msra.mxu0 %v792
    %927 = vmatpush.bf16.msra.mxu0 %v791
    %928 = vmatpush.bf16.msra.mxu0 %v790
    %929 = vmatpush.bf16.msra.mxu0 %v789
    %930 = vmatpush.bf16.msra.mxu0 %v788
    %931 = vmatpush.bf16.msra.mxu0 %v787
    %932 = vmatpush.bf16.msra.mxu0 %v786
    %933 = vmatmul.bf16.gmra.mxu0 %v911
    %v934 = vpop.f32.mrf.mxu0
    %v935 = vadd.f32 %v922, %v934
    %v936 = vpop.f32.mrf.mxu0
    %937 = vdwg.mxu0
    %v938 = vtanh.pop %v935
    %939 = vst [vmem:[#allocation2 + $0x8] sm:$0xff] %v938
    %v940 = vpack.c.bf16 %v854, %v854
    %941 = vmatpush.bf16.msra.mxu0 %v305
    %942 = vmatpush.bf16.msra.mxu0 %v304
    %943 = vmatpush.bf16.msra.mxu0 %v303
    %944 = vmatpush.bf16.msra.mxu0 %v302
    %945 = vmatpush.bf16.msra.mxu0 %v301
    %946 = vmatpush.bf16.msra.mxu0 %v300
    %947 = vmatpush.bf16.msra.mxu0 %v299
    %948 = vmatpush.bf16.msra.mxu0 %v298
    %949 = vmatmul.bf16.gmra.mxu0 %v940
    %v950 = vpop.f32.mrf.mxu0
    %v951 = vadd.f32 0.0, %v950
    %v952 = vpop.f32.mrf.mxu0
    %953 = vdwg.mxu0
    %v954 = vadd.f32 %v251, %v951
    %v955 = vadd.f32 %v954, %v169
    %v956 = vtanh.pop %v955
    %v957 = vpack.c.bf16 %v882, %v882
    %958 = vmatpush.bf16.msra.mxu0 %v419
    %959 = vmatpush.bf16.msra.mxu0 %v418
    %960 = vmatpush.bf16.msra.mxu0 %v417
    %961 = vmatpush.bf16.msra.mxu0 %v416
    %962 = vmatpush.bf16.msra.mxu0 %v415
    %963 = vmatpush.bf16.msra.mxu0 %v414
    %964 = vmatpush.bf16.msra.mxu0 %v413
    %965 = vmatpush.bf16.msra.mxu0 %v412
    %966 = vmatmul.bf16.gmra.mxu0 %v940
    %v967 = vpop.f32.mrf.mxu0
    %v968 = vadd.f32 %v171, %v967
    %v969 = vpop.f32.mrf.mxu0
    %970 = vdwg.mxu0
    %971 = vmatpush.bf16.msra.mxu0 %v427
    %972 = vmatpush.bf16.msra.mxu0 %v426
    %973 = vmatpush.bf16.msra.mxu0 %v425
    %974 = vmatpush.bf16.msra.mxu0 %v424
    %975 = vmatpush.bf16.msra.mxu0 %v423
    %976 = vmatpush.bf16.msra.mxu0 %v422
    %977 = vmatpush.bf16.msra.mxu0 %v421
    %978 = vmatpush.bf16.msra.mxu0 %v420
    %979 = vmatmul.bf16.gmra.mxu0 %v957
    %v980 = vpop.f32.mrf.mxu0
    %v981 = vadd.f32 %v968, %v980
    %v982 = vpop.f32.mrf.mxu0
    %983 = vdwg.mxu0
    %v984 = vtanh.pop %v981
    %v985 = vpack.c.bf16 %v910, %v910
    %986 = vmatpush.bf16.msra.mxu0 %v588
    %987 = vmatpush.bf16.msra.mxu0 %v587
    %988 = vmatpush.bf16.msra.mxu0 %v586
    %989 = vmatpush.bf16.msra.mxu0 %v585
    %990 = vmatpush.bf16.msra.mxu0 %v584
    %991 = vmatpush.bf16.msra.mxu0 %v583
    %992 = vmatpush.bf16.msra.mxu0 %v582
    %993 = vmatpush.bf16.msra.mxu0 %v581
    %994 = vmatmul.bf16.gmra.mxu0 %v957
    %v995 = vpop.f32.mrf.mxu0
    %v996 = vadd.f32 %v173, %v995
    %v997 = vpop.f32.mrf.mxu0
    %998 = vdwg.mxu0
    %999 = vmatpush.bf16.msra.mxu0 %v596
    %1000 = vmatpush.bf16.msra.mxu0 %v595
    %1001 = vmatpush.bf16.msra.mxu0 %v594
    %1002 = vmatpush.bf16.msra.mxu0 %v593
    %1003 = vmatpush.bf16.msra.mxu0 %v592
    %1004 = vmatpush.bf16.msra.mxu0 %v591
    %1005 = vmatpush.bf16.msra.mxu0 %v590
    %1006 = vmatpush.bf16.msra.mxu0 %v589
    %1007 = vmatmul.bf16.gmra.mxu0 %v985
    %v1008 = vpop.f32.mrf.mxu0
    %v1009 = vadd.f32 %v996, %v1008
    %v1010 = vpop.f32.mrf.mxu0
    %1011 = vdwg.mxu0
    %v1012 = vtanh.pop %v1009
    %v1013 = vpack.c.bf16 %v938, %v938
    %1014 = vmatpush.bf16.msra.mxu0 %v785
    %1015 = vmatpush.bf16.msra.mxu0 %v784
    %1016 = vmatpush.bf16.msra.mxu0 %v783
    %1017 = vmatpush.bf16.msra.mxu0 %v782
    %1018 = vmatpush.bf16.msra.mxu0 %v781
    %1019 = vmatpush.bf16.msra.mxu0 %v780
    %1020 = vmatpush.bf16.msra.mxu0 %v779
    %1021 = vmatpush.bf16.msra.mxu0 %v778
    %1022 = vmatmul.bf16.gmra.mxu0 %v985
    %v1023 = vpop.f32.mrf.mxu0
    %v1024 = vadd.f32 %v175, %v1023
    %v1025 = vpop.f32.mrf.mxu0
    %1026 = vdwg.mxu0
    %1027 = vmatpush.bf16.msra.mxu0 %v793
    %1028 = vmatpush.bf16.msra.mxu0 %v792
    %1029 = vmatpush.bf16.msra.mxu0 %v791
    %1030 = vmatpush.bf16.msra.mxu0 %v790
    %1031 = vmatpush.bf16.msra.mxu0 %v789
    %1032 = vmatpush.bf16.msra.mxu0 %v788
    %1033 = vmatpush.bf16.msra.mxu0 %v787
    %1034 = vmatpush.bf16.msra.mxu0 %v786
    %1035 = vmatmul.bf16.gmra.mxu0 %v1013
    %v1036 = vpop.f32.mrf.mxu0
    %v1037 = vadd.f32 %v1024, %v1036
    %v1038 = vpop.f32.mrf.mxu0
    %1039 = vdwg.mxu0
    %v1040 = vtanh.pop %v1037
    %1041 = vst [vmem:[#allocation2 + $0x10] sm:$0xff] %v1040
    %v1042 = vpack.c.bf16 %v956, %v956
    %1043 = vmatpush.bf16.msra.mxu0 %v305
    %1044 = vmatpush.bf16.msra.mxu0 %v304
    %1045 = vmatpush.bf16.msra.mxu0 %v303
    %1046 = vmatpush.bf16.msra.mxu0 %v302
    %1047 = vmatpush.bf16.msra.mxu0 %v301
    %1048 = vmatpush.bf16.msra.mxu0 %v300
    %1049 = vmatpush.bf16.msra.mxu0 %v299
    %1050 = vmatpush.bf16.msra.mxu0 %v298
    %1051 = vmatmul.bf16.gmra.mxu0 %v1042
    %v1052 = vpop.f32.mrf.mxu0
    %v1053 = vadd.f32 0.0, %v1052
    %v1054 = vpop.f32.mrf.mxu0
    %1055 = vdwg.mxu0
    %v1056 = vadd.f32 %v254, %v1053
    %v1057 = vadd.f32 %v1056, %v169
    %v1058 = vtanh.pop %v1057
    %v1059 = vpack.c.bf16 %v984, %v984
    %1060 = vmatpush.bf16.msra.mxu0 %v419
    %1061 = vmatpush.bf16.msra.mxu0 %v418
    %1062 = vmatpush.bf16.msra.mxu0 %v417
    %1063 = vmatpush.bf16.msra.mxu0 %v416
    %1064 = vmatpush.bf16.msra.mxu0 %v415
    %1065 = vmatpush.bf16.msra.mxu0 %v414
    %1066 = vmatpush.bf16.msra.mxu0 %v413
    %1067 = vmatpush.bf16.msra.mxu0 %v412
    %1068 = vmatmul.bf16.gmra.mxu0 %v1042
    %v1069 = vpop.f32.mrf.mxu0
    %v1070 = vadd.f32 %v171, %v1069
    %v1071 = vpop.f32.mrf.mxu0
    %1072 = vdwg.mxu0
    %1073 = vmatpush.bf16.msra.mxu0 %v427
    %1074 = vmatpush.bf16.msra.mxu0 %v426
    %1075 = vmatpush.bf16.msra.mxu0 %v425
    %1076 = vmatpush.bf16.msra.mxu0 %v424
    %1077 = vmatpush.bf16.msra.mxu0 %v423
    %1078 = vmatpush.bf16.msra.mxu0 %v422
    %1079 = vmatpush.bf16.msra.mxu0 %v421
    %1080 = vmatpush.bf16.msra.mxu0 %v420
    %1081 = vmatmul.bf16.gmra.mxu0 %v1059
    %v1082 = vpop.f32.mrf.mxu0
    %v1083 = vadd.f32 %v1070, %v1082
    %v1084 = vpop.f32.mrf.mxu0
    %1085 = vdwg.mxu0
    %v1086 = vtanh.pop %v1083
    %v1087 = vpack.c.bf16 %v1012, %v1012
    %1088 = vmatpush.bf16.msra.mxu0 %v588
    %1089 = vmatpush.bf16.msra.mxu0 %v587
    %1090 = vmatpush.bf16.msra.mxu0 %v586
    %1091 = vmatpush.bf16.msra.mxu0 %v585
    %1092 = vmatpush.bf16.msra.mxu0 %v584
    %1093 = vmatpush.bf16.msra.mxu0 %v583
    %1094 = vmatpush.bf16.msra.mxu0 %v582
    %1095 = vmatpush.bf16.msra.mxu0 %v581
    %1096 = vmatmul.bf16.gmra.mxu0 %v1059
    %v1097 = vpop.f32.mrf.mxu0
    %v1098 = vadd.f32 %v173, %v1097
    %v1099 = vpop.f32.mrf.mxu0
    %1100 = vdwg.mxu0
    %1101 = vmatpush.bf16.msra.mxu0 %v596
    %1102 = vmatpush.bf16.msra.mxu0 %v595
    %1103 = vmatpush.bf16.msra.mxu0 %v594
    %1104 = vmatpush.bf16.msra.mxu0 %v593
    %1105 = vmatpush.bf16.msra.mxu0 %v592
    %1106 = vmatpush.bf16.msra.mxu0 %v591
    %1107 = vmatpush.bf16.msra.mxu0 %v590
    %1108 = vmatpush.bf16.msra.mxu0 %v589
    %1109 = vmatmul.bf16.gmra.mxu0 %v1087
    %v1110 = vpop.f32.mrf.mxu0
    %v1111 = vadd.f32 %v1098, %v1110
    %v1112 = vpop.f32.mrf.mxu0
    %1113 = vdwg.mxu0
    %v1114 = vtanh.pop %v1111
    %v1115 = vpack.c.bf16 %v1040, %v1040
    %1116 = vmatpush.bf16.msra.mxu0 %v785
    %1117 = vmatpush.bf16.msra.mxu0 %v784
    %1118 = vmatpush.bf16.msra.mxu0 %v783
    %1119 = vmatpush.bf16.msra.mxu0 %v782
    %1120 = vmatpush.bf16.msra.mxu0 %v781
    %1121 = vmatpush.bf16.msra.mxu0 %v780
    %1122 = vmatpush.bf16.msra.mxu0 %v779
    %1123 = vmatpush.bf16.msra.mxu0 %v778
    %1124 = vmatmul.bf16.gmra.mxu0 %v1087
    %v1125 = vpop.f32.mrf.mxu0
    %v1126 = vadd.f32 %v175, %v1125
    %v1127 = vpop.f32.mrf.mxu0
    %1128 = vdwg.mxu0
    %1129 = vmatpush.bf16.msra.mxu0 %v793
    %1130 = vmatpush.bf16.msra.mxu0 %v792
    %1131 = vmatpush.bf16.msra.mxu0 %v791
    %1132 = vmatpush.bf16.msra.mxu0 %v790
    %1133 = vmatpush.bf16.msra.mxu0 %v789
    %1134 = vmatpush.bf16.msra.mxu0 %v788
    %1135 = vmatpush.bf16.msra.mxu0 %v787
    %1136 = vmatpush.bf16.msra.mxu0 %v786
    %1137 = vmatmul.bf16.gmra.mxu0 %v1115
    %v1138 = vpop.f32.mrf.mxu0
    %v1139 = vadd.f32 %v1126, %v1138
    %v1140 = vpop.f32.mrf.mxu0
    %1141 = vdwg.mxu0
    %v1142 = vtanh.pop %v1139
    %1143 = vst [vmem:[#allocation2 + $0x18] sm:$0xff] %v1142
    %v1144 = vpack.c.bf16 %v1058, %v1058
    %1145 = vmatpush.bf16.msra.mxu0 %v305
    %1146 = vmatpush.bf16.msra.mxu0 %v304
    %1147 = vmatpush.bf16.msra.mxu0 %v303
    %1148 = vmatpush.bf16.msra.mxu0 %v302
    %1149 = vmatpush.bf16.msra.mxu0 %v301
    %1150 = vmatpush.bf16.msra.mxu0 %v300
    %1151 = vmatpush.bf16.msra.mxu0 %v299
    %1152 = vmatpush.bf16.msra.mxu0 %v298
    %1153 = vmatmul.bf16.gmra.mxu0 %v1144
    %v1154 = vpop.f32.mrf.mxu0
    %v1155 = vadd.f32 0.0, %v1154
    %v1156 = vpop.f32.mrf.mxu0
    %1157 = vdwg.mxu0
    %v1158 = vadd.f32 %v256, %v1155
    %v1159 = vadd.f32 %v1158, %v169
    %v1160 = vtanh.pop %v1159
    %v1161 = vpack.c.bf16 %v1086, %v1086
    %1162 = vmatpush.bf16.msra.mxu0 %v419
    %1163 = vmatpush.bf16.msra.mxu0 %v418
    %1164 = vmatpush.bf16.msra.mxu0 %v417
    %1165 = vmatpush.bf16.msra.mxu0 %v416
    %1166 = vmatpush.bf16.msra.mxu0 %v415
    %1167 = vmatpush.bf16.msra.mxu0 %v414
    %1168 = vmatpush.bf16.msra.mxu0 %v413
    %1169 = vmatpush.bf16.msra.mxu0 %v412
    %1170 = vmatmul.bf16.gmra.mxu0 %v1144
    %v1171 = vpop.f32.mrf.mxu0
    %v1172 = vadd.f32 %v171, %v1171
    %v1173 = vpop.f32.mrf.mxu0
    %1174 = vdwg.mxu0
    %1175 = vmatpush.bf16.msra.mxu0 %v427
    %1176 = vmatpush.bf16.msra.mxu0 %v426
    %1177 = vmatpush.bf16.msra.mxu0 %v425
    %1178 = vmatpush.bf16.msra.mxu0 %v424
    %1179 = vmatpush.bf16.msra.mxu0 %v423
    %1180 = vmatpush.bf16.msra.mxu0 %v422
    %1181 = vmatpush.bf16.msra.mxu0 %v421
    %1182 = vmatpush.bf16.msra.mxu0 %v420
    %1183 = vmatmul.bf16.gmra.mxu0 %v1161
    %v1184 = vpop.f32.mrf.mxu0
    %v1185 = vadd.f32 %v1172, %v1184
    %v1186 = vpop.f32.mrf.mxu0
    %1187 = vdwg.mxu0
    %v1188 = vtanh.pop %v1185
    %v1189 = vpack.c.bf16 %v1114, %v1114
    %1190 = vmatpush.bf16.msra.mxu0 %v588
    %1191 = vmatpush.bf16.msra.mxu0 %v587
    %1192 = vmatpush.bf16.msra.mxu0 %v586
    %1193 = vmatpush.bf16.msra.mxu0 %v585
    %1194 = vmatpush.bf16.msra.mxu0 %v584
    %1195 = vmatpush.bf16.msra.mxu0 %v583
    %1196 = vmatpush.bf16.msra.mxu0 %v582
    %1197 = vmatpush.bf16.msra.mxu0 %v581
    %1198 = vmatmul.bf16.gmra.mxu0 %v1161
    %v1199 = vpop.f32.mrf.mxu0
    %v1200 = vadd.f32 %v173, %v1199
    %v1201 = vpop.f32.mrf.mxu0
    %1202 = vdwg.mxu0
    %1203 = vmatpush.bf16.msra.mxu0 %v596
    %1204 = vmatpush.bf16.msra.mxu0 %v595
    %1205 = vmatpush.bf16.msra.mxu0 %v594
    %1206 = vmatpush.bf16.msra.mxu0 %v593
    %1207 = vmatpush.bf16.msra.mxu0 %v592
    %1208 = vmatpush.bf16.msra.mxu0 %v591
    %1209 = vmatpush.bf16.msra.mxu0 %v590
    %1210 = vmatpush.bf16.msra.mxu0 %v589
    %1211 = vmatmul.bf16.gmra.mxu0 %v1189
    %v1212 = vpop.f32.mrf.mxu0
    %v1213 = vadd.f32 %v1200, %v1212
    %v1214 = vpop.f32.mrf.mxu0
    %1215 = vdwg.mxu0
    %v1216 = vtanh.pop %v1213
    %v1217 = vpack.c.bf16 %v1142, %v1142
    %1218 = vmatpush.bf16.msra.mxu0 %v785
    %1219 = vmatpush.bf16.msra.mxu0 %v784
    %1220 = vmatpush.bf16.msra.mxu0 %v783
    %1221 = vmatpush.bf16.msra.mxu0 %v782
    %1222 = vmatpush.bf16.msra.mxu0 %v781
    %1223 = vmatpush.bf16.msra.mxu0 %v780
    %1224 = vmatpush.bf16.msra.mxu0 %v779
    %1225 = vmatpush.bf16.msra.mxu0 %v778
    %1226 = vmatmul.bf16.gmra.mxu0 %v1189
    %v1227 = vpop.f32.mrf.mxu0
    %v1228 = vadd.f32 %v175, %v1227
    %v1229 = vpop.f32.mrf.mxu0
    %1230 = vdwg.mxu0
    %1231 = vmatpush.bf16.msra.mxu0 %v793
    %1232 = vmatpush.bf16.msra.mxu0 %v792
    %1233 = vmatpush.bf16.msra.mxu0 %v791
    %1234 = vmatpush.bf16.msra.mxu0 %v790
    %1235 = vmatpush.bf16.msra.mxu0 %v789
    %1236 = vmatpush.bf16.msra.mxu0 %v788
    %1237 = vmatpush.bf16.msra.mxu0 %v787
    %1238 = vmatpush.bf16.msra.mxu0 %v786
    %1239 = vmatmul.bf16.gmra.mxu0 %v1217
    %v1240 = vpop.f32.mrf.mxu0
    %v1241 = vadd.f32 %v1228, %v1240
    %v1242 = vpop.f32.mrf.mxu0
    %1243 = vdwg.mxu0
    %v1244 = vtanh.pop %v1241
    %1245 = vst [vmem:[#allocation2 + $0x20] sm:$0xff] %v1244
    %v1246 = vpack.c.bf16 %v1160, %v1160
    %v1247 = vpack.c.bf16 %v1188, %v1188
    %1248 = vmatpush.bf16.msra.mxu0 %v419
    %1249 = vmatpush.bf16.msra.mxu0 %v418
    %1250 = vmatpush.bf16.msra.mxu0 %v417
    %1251 = vmatpush.bf16.msra.mxu0 %v416
    %1252 = vmatpush.bf16.msra.mxu0 %v415
    %1253 = vmatpush.bf16.msra.mxu0 %v414
    %1254 = vmatpush.bf16.msra.mxu0 %v413
    %1255 = vmatpush.bf16.msra.mxu0 %v412
    %1256 = vmatmul.bf16.gmra.mxu0 %v1246
    %v1257 = vpop.f32.mrf.mxu0
    %v1258 = vadd.f32 %v171, %v1257
    %v1259 = vpop.f32.mrf.mxu0
    %1260 = vdwg.mxu0
    %1261 = vmatpush.bf16.msra.mxu0 %v427
    %1262 = vmatpush.bf16.msra.mxu0 %v426
    %1263 = vmatpush.bf16.msra.mxu0 %v425
    %1264 = vmatpush.bf16.msra.mxu0 %v424
    %1265 = vmatpush.bf16.msra.mxu0 %v423
    %1266 = vmatpush.bf16.msra.mxu0 %v422
    %1267 = vmatpush.bf16.msra.mxu0 %v421
    %1268 = vmatpush.bf16.msra.mxu0 %v420
    %1269 = vmatmul.bf16.gmra.mxu0 %v1247
    %v1270 = vpop.f32.mrf.mxu0
    %v1271 = vadd.f32 %v1258, %v1270
    %v1272 = vpop.f32.mrf.mxu0
    %1273 = vdwg.mxu0
    %v1274 = vtanh.pop %v1271
    %v1275 = vpack.c.bf16 %v1216, %v1216
    %1276 = vmatpush.bf16.msra.mxu0 %v588
    %1277 = vmatpush.bf16.msra.mxu0 %v587
    %1278 = vmatpush.bf16.msra.mxu0 %v586
    %1279 = vmatpush.bf16.msra.mxu0 %v585
    %1280 = vmatpush.bf16.msra.mxu0 %v584
    %1281 = vmatpush.bf16.msra.mxu0 %v583
    %1282 = vmatpush.bf16.msra.mxu0 %v582
    %1283 = vmatpush.bf16.msra.mxu0 %v581
    %1284 = vmatmul.bf16.gmra.mxu0 %v1247
    %v1285 = vpop.f32.mrf.mxu0
    %v1286 = vadd.f32 %v173, %v1285
    %v1287 = vpop.f32.mrf.mxu0
    %1288 = vdwg.mxu0
    %1289 = vmatpush.bf16.msra.mxu0 %v596
    %1290 = vmatpush.bf16.msra.mxu0 %v595
    %1291 = vmatpush.bf16.msra.mxu0 %v594
    %1292 = vmatpush.bf16.msra.mxu0 %v593
    %1293 = vmatpush.bf16.msra.mxu0 %v592
    %1294 = vmatpush.bf16.msra.mxu0 %v591
    %1295 = vmatpush.bf16.msra.mxu0 %v590
    %1296 = vmatpush.bf16.msra.mxu0 %v589
    %1297 = vmatmul.bf16.gmra.mxu0 %v1275
    %v1298 = vpop.f32.mrf.mxu0
    %v1299 = vadd.f32 %v1286, %v1298
    %v1300 = vpop.f32.mrf.mxu0
    %1301 = vdwg.mxu0
    %v1302 = vtanh.pop %v1299
    %v1303 = vpack.c.bf16 %v1244, %v1244
    %1304 = vmatpush.bf16.msra.mxu0 %v785
    %1305 = vmatpush.bf16.msra.mxu0 %v784
    %1306 = vmatpush.bf16.msra.mxu0 %v783
    %1307 = vmatpush.bf16.msra.mxu0 %v782
    %1308 = vmatpush.bf16.msra.mxu0 %v781
    %1309 = vmatpush.bf16.msra.mxu0 %v780
    %1310 = vmatpush.bf16.msra.mxu0 %v779
    %1311 = vmatpush.bf16.msra.mxu0 %v778
    %1312 = vmatmul.bf16.gmra.mxu0 %v1275
    %v1313 = vpop.f32.mrf.mxu0
    %v1314 = vadd.f32 %v175, %v1313
    %v1315 = vpop.f32.mrf.mxu0
    %1316 = vdwg.mxu0
    %1317 = vmatpush.bf16.msra.mxu0 %v793
    %1318 = vmatpush.bf16.msra.mxu0 %v792
    %1319 = vmatpush.bf16.msra.mxu0 %v791
    %1320 = vmatpush.bf16.msra.mxu0 %v790
    %1321 = vmatpush.bf16.msra.mxu0 %v789
    %1322 = vmatpush.bf16.msra.mxu0 %v788
    %1323 = vmatpush.bf16.msra.mxu0 %v787
    %1324 = vmatpush.bf16.msra.mxu0 %v786
    %1325 = vmatmul.bf16.gmra.mxu0 %v1303
    %v1326 = vpop.f32.mrf.mxu0
    %v1327 = vadd.f32 %v1314, %v1326
    %v1328 = vpop.f32.mrf.mxu0
    %1329 = vdwg.mxu0
    %v1330 = vtanh.pop %v1327
    %1331 = vst [vmem:[#allocation2 + $0x28] sm:$0xff] %v1330
    %v1332 = vpack.c.bf16 %v1274, %v1274
    %v1333 = vpack.c.bf16 %v1302, %v1302
    %1334 = vmatpush.bf16.msra.mxu0 %v588
    %1335 = vmatpush.bf16.msra.mxu0 %v587
    %1336 = vmatpush.bf16.msra.mxu0 %v586
    %1337 = vmatpush.bf16.msra.mxu0 %v585
    %1338 = vmatpush.bf16.msra.mxu0 %v584
    %1339 = vmatpush.bf16.msra.mxu0 %v583
    %1340 = vmatpush.bf16.msra.mxu0 %v582
    %1341 = vmatpush.bf16.msra.mxu0 %v581
    %1342 = vmatmul.bf16.gmra.mxu0 %v1332
    %v1343 = vpop.f32.mrf.mxu0
    %v1344 = vadd.f32 %v173, %v1343
    %v1345 = vpop.f32.mrf.mxu0
    %1346 = vdwg.mxu0
    %1347 = vmatpush.bf16.msra.mxu0 %v596
    %1348 = vmatpush.bf16.msra.mxu0 %v595
    %1349 = vmatpush.bf16.msra.mxu0 %v594
    %1350 = vmatpush.bf16.msra.mxu0 %v593
    %1351 = vmatpush.bf16.msra.mxu0 %v592
    %1352 = vmatpush.bf16.msra.mxu0 %v591
    %1353 = vmatpush.bf16.msra.mxu0 %v590
    %1354 = vmatpush.bf16.msra.mxu0 %v589
    %1355 = vmatmul.bf16.gmra.mxu0 %v1333
    %v1356 = vpop.f32.mrf.mxu0
    %v1357 = vadd.f32 %v1344, %v1356
    %v1358 = vpop.f32.mrf.mxu0
    %1359 = vdwg.mxu0
    %v1360 = vtanh.pop %v1357
    %v1361 = vpack.c.bf16 %v1330, %v1330
    %1362 = vmatpush.bf16.msra.mxu0 %v785
    %1363 = vmatpush.bf16.msra.mxu0 %v784
    %1364 = vmatpush.bf16.msra.mxu0 %v783
    %1365 = vmatpush.bf16.msra.mxu0 %v782
    %1366 = vmatpush.bf16.msra.mxu0 %v781
    %1367 = vmatpush.bf16.msra.mxu0 %v780
    %1368 = vmatpush.bf16.msra.mxu0 %v779
    %1369 = vmatpush.bf16.msra.mxu0 %v778
    %1370 = vmatmul.bf16.gmra.mxu0 %v1333
    %v1371 = vpop.f32.mrf.mxu0
    %v1372 = vadd.f32 %v175, %v1371
    %v1373 = vpop.f32.mrf.mxu0
    %1374 = vdwg.mxu0
    %1375 = vmatpush.bf16.msra.mxu0 %v793
    %1376 = vmatpush.bf16.msra.mxu0 %v792
    %1377 = vmatpush.bf16.msra.mxu0 %v791
    %1378 = vmatpush.bf16.msra.mxu0 %v790
    %1379 = vmatpush.bf16.msra.mxu0 %v789
    %1380 = vmatpush.bf16.msra.mxu0 %v788
    %1381 = vmatpush.bf16.msra.mxu0 %v787
    %1382 = vmatpush.bf16.msra.mxu0 %v786
    %1383 = vmatmul.bf16.gmra.mxu0 %v1361
    %v1384 = vpop.f32.mrf.mxu0
    %v1385 = vadd.f32 %v1372, %v1384
    %v1386 = vpop.f32.mrf.mxu0
    %1387 = vdwg.mxu0
    %v1388 = vtanh.pop %v1385
    %1389 = vst [vmem:[#allocation2 + $0x30] sm:$0xff] %v1388
    %v1390 = vpack.c.bf16 %v1360, %v1360
    %v1391 = vpack.c.bf16 %v1388, %v1388
    %1392 = vmatpush.bf16.msra.mxu0 %v785
    %1393 = vmatpush.bf16.msra.mxu0 %v784
    %1394 = vmatpush.bf16.msra.mxu0 %v783
    %1395 = vmatpush.bf16.msra.mxu0 %v782
    %1396 = vmatpush.bf16.msra.mxu0 %v781
    %1397 = vmatpush.bf16.msra.mxu0 %v780
    %1398 = vmatpush.bf16.msra.mxu0 %v779
    %1399 = vmatpush.bf16.msra.mxu0 %v778
    %1400 = vmatmul.bf16.gmra.mxu0 %v1390
    %v1401 = vpop.f32.mrf.mxu0
    %v1402 = vadd.f32 %v175, %v1401
    %v1403 = vpop.f32.mrf.mxu0
    %1404 = vdwg.mxu0
    %1405 = vmatpush.bf16.msra.mxu0 %v793
    %1406 = vmatpush.bf16.msra.mxu0 %v792
    %1407 = vmatpush.bf16.msra.mxu0 %v791
    %1408 = vmatpush.bf16.msra.mxu0 %v790
    %1409 = vmatpush.bf16.msra.mxu0 %v789
    %1410 = vmatpush.bf16.msra.mxu0 %v788
    %1411 = vmatpush.bf16.msra.mxu0 %v787
    %1412 = vmatpush.bf16.msra.mxu0 %v786
    %1413 = vmatmul.bf16.gmra.mxu0 %v1391
    %v1414 = vpop.f32.mrf.mxu0
    %v1415 = vadd.f32 %v1402, %v1414
    %v1416 = vpop.f32.mrf.mxu0
    %1417 = vdwg.mxu0
    %v1418 = vtanh.pop %v1415
    %1419 = vst [vmem:[#allocation2 + $0x38] sm:$0xff] %v1418
    %1420 = vst [vmem:[%s5] sm:$0xff] %v1160
    %s1421 = scalar_lea.vmem %s5, 8
    %1422 = vst [vmem:[%s1421] sm:$0xff] %v1274
    %s1423 = scalar_lea.vmem %s5, 16
    %1424 = vst [vmem:[%s1423] sm:$0xff] %v1360
    %s1425 = scalar_lea.vmem %s5, 24
    %1426 = vst [vmem:[%s1425] sm:$0xff] %v1418
    %v1427 = vld [vmem:[#allocation5 + $0x1c0] sm:$0xf]
    %v1428 = vunpack.c.l.bf16 %v1427
    %v1429 = vld [vmem:[#allocation2] sm:$0xff]
    %v1430 = vld [vmem:[#allocation2 + $0x8] sm:$0xff]
    %v1431 = vld [vmem:[#allocation2 + $0x10] sm:$0xff]
    %v1432 = vld [vmem:[#allocation2 + $0x18] sm:$0xff]
    %v1433 = vld [vmem:[#allocation2 + $0x20] sm:$0xff]
    %v1434 = vld [vmem:[#allocation2 + $0x28] sm:$0xff]
    %v1435 = vld [vmem:[#allocation2 + $0x30] sm:$0xff]
    %v1436 = vld [vmem:[#allocation2 + $0x38] sm:$0xff]
    %v1437 = vld [vmem:[#allocation5] sm:$0xf]
    %v1438 = vld [vmem:[#allocation5 + $0x4] sm:$0xf]
    %v1439 = vld [vmem:[#allocation5 + $0x8] sm:$0xf]
    %v1440 = vld [vmem:[#allocation5 + $0xc] sm:$0xf]
    %v1441 = vld [vmem:[#allocation5 + $0x10] sm:$0xf]
    %v1442 = vld [vmem:[#allocation5 + $0x14] sm:$0xf]
    %v1443 = vld [vmem:[#allocation5 + $0x18] sm:$0xf]
    %v1444 = vld [vmem:[#allocation5 + $0x1c] sm:$0xf]
    %v1445 = vld [vmem:[#allocation5 + $0x20] sm:$0xf]
    %v1446 = vld [vmem:[#allocation5 + $0x24] sm:$0xf]
    %v1447 = vld [vmem:[#allocation5 + $0x28] sm:$0xf]
    %v1448 = vld [vmem:[#allocation5 + $0x2c] sm:$0xf]
    %v1449 = vld [vmem:[#allocation5 + $0x30] sm:$0xf]
    %v1450 = vld [vmem:[#allocation5 + $0x34] sm:$0xf]
    %v1451 = vld [vmem:[#allocation5 + $0x38] sm:$0xf]
    %v1452 = vld [vmem:[#allocation5 + $0x3c] sm:$0xf]
    %v1453 = vpack.c.bf16 %v1430, %v1429
    %v1454 = vpack.c.bf16 %v1432, %v1431
    %v1455 = vpack.c.bf16 %v1434, %v1433
    %v1456 = vpack.c.bf16 %v1436, %v1435
    %v1457 = vperm.slane %v1428, 0
    %v1474 = vunpack.c.l.b16 %v1437
    %v1475 = vunpack.c.l.b16 %v1438
    %v1476 = vunpack.c.l.b16 %v1439
    %v1477 = vunpack.c.l.b16 %v1440
    %v1478 = vunpack.c.l.b16 %v1441
    %v1479 = vunpack.c.l.b16 %v1442
    %v1480 = vunpack.c.l.b16 %v1443
    %v1481 = vunpack.c.l.b16 %v1444
    %v1482 = vunpack.c.l.b16 %v1445
    %v1483 = vunpack.c.l.b16 %v1446
    %v1484 = vunpack.c.l.b16 %v1447
    %v1485 = vunpack.c.l.b16 %v1448
    %v1486 = vunpack.c.l.b16 %v1449
    %v1487 = vunpack.c.l.b16 %v1450
    %v1488 = vunpack.c.l.b16 %v1451
    %v1489 = vunpack.c.l.b16 %v1452
    %v1490 = vpack.c.b16 %v1475, %v1474
    %v1491 = vpack.c.b16 %v1477, %v1476
    %v1492 = vpack.c.b16 %v1479, %v1478
    %v1493 = vpack.c.b16 %v1481, %v1480
    %v1494 = vpack.c.b16 %v1483, %v1482
    %v1495 = vpack.c.b16 %v1485, %v1484
    %v1496 = vpack.c.b16 %v1487, %v1486
    %v1497 = vpack.c.b16 %v1489, %v1488
    %1506 = vmatpush.bf16.msra.mxu0 %v1497
    %1507 = vmatpush.bf16.msra.mxu0 %v1496
    %1508 = vmatpush.bf16.msra.mxu0 %v1495
    %1509 = vmatpush.bf16.msra.mxu0 %v1494
    %1510 = vmatpush.bf16.msra.mxu0 %v1493
    %1511 = vmatpush.bf16.msra.mxu0 %v1492
    %1512 = vmatpush.bf16.msra.mxu0 %v1491
    %1513 = vmatpush.bf16.msra.mxu0 %v1490
    %1514 = vmatmul.bf16.gmra.mxu0 %v1453
    %v1515 = vpop.f32.mrf.mxu0
    %v1516 = vadd.f32 %v1457, %v1515
    %v1517 = vpop.f32.mrf.mxu0
    %v1518 = vadd.f32 %v1457, %v1517
    %1519 = vmatmul.bf16.gmra.mxu0 %v1454
    %v1520 = vpop.f32.mrf.mxu0
    %v1521 = vadd.f32 %v1457, %v1520
    %v1522 = vpop.f32.mrf.mxu0
    %v1523 = vadd.f32 %v1457, %v1522
    %1524 = vmatmul.bf16.gmra.mxu0 %v1455
    %v1525 = vpop.f32.mrf.mxu0
    %v1526 = vadd.f32 %v1457, %v1525
    %v1527 = vpop.f32.mrf.mxu0
    %v1528 = vadd.f32 %v1457, %v1527
    %1529 = vmatmul.bf16.gmra.mxu0 %v1456
    %v1530 = vpop.f32.mrf.mxu0
    %v1531 = vadd.f32 %v1457, %v1530
    %v1532 = vpop.f32.mrf.mxu0
    %v1533 = vadd.f32 %v1457, %v1532
    %1534 = vdwg.mxu0
    %v1535 = vmul.f32 %v1516, 0.01
    %v1536 = vmul.f32 %v1518, 0.01
    %v1537 = vmul.f32 %v1521, 0.01
    %v1538 = vmul.f32 %v1523, 0.01
    %v1539 = vmul.f32 %v1526, 0.01
    %v1540 = vmul.f32 %v1528, 0.01
    %v1541 = vmul.f32 %v1531, 0.01
    %v1542 = vmul.f32 %v1533, 0.01
    %v1543 = vmax.f32 %v1516, %v1535
    %v1544 = vmax.f32 %v1518, %v1536
    %v1545 = vmax.f32 %v1521, %v1537
    %v1546 = vmax.f32 %v1523, %v1538
    %v1547 = vmax.f32 %v1526, %v1539
    %v1548 = vmax.f32 %v1528, %v1540
    %v1549 = vmax.f32 %v1531, %v1541
    %v1550 = vmax.f32 %v1533, %v1542
    %v1551 = vld [vmem:[#allocation5 + $0x40] sm:$0xf]
    %v1552 = vld [vmem:[#allocation5 + $0x44] sm:$0xf]
    %v1553 = vld [vmem:[#allocation5 + $0x48] sm:$0xf]
    %v1554 = vld [vmem:[#allocation5 + $0x4c] sm:$0xf]
    %v1555 = vld [vmem:[#allocation5 + $0x50] sm:$0xf]
    %v1556 = vld [vmem:[#allocation5 + $0x54] sm:$0xf]
    %v1557 = vld [vmem:[#allocation5 + $0x58] sm:$0xf]
    %v1558 = vld [vmem:[#allocation5 + $0x5c] sm:$0xf]
    %v1559 = vld [vmem:[#allocation5 + $0x60] sm:$0xf]
    %v1560 = vld [vmem:[#allocation5 + $0x64] sm:$0xf]
    %v1561 = vld [vmem:[#allocation5 + $0x68] sm:$0xf]
    %v1562 = vld [vmem:[#allocation5 + $0x6c] sm:$0xf]
    %v1563 = vld [vmem:[#allocation5 + $0x70] sm:$0xf]
    %v1564 = vld [vmem:[#allocation5 + $0x74] sm:$0xf]
    %v1565 = vld [vmem:[#allocation5 + $0x78] sm:$0xf]
    %v1566 = vld [vmem:[#allocation5 + $0x7c] sm:$0xf]
    %v1567 = vpack.c.bf16 %v1544, %v1543
    %v1568 = vpack.c.bf16 %v1546, %v1545
    %v1569 = vpack.c.bf16 %v1548, %v1547
    %v1570 = vpack.c.bf16 %v1550, %v1549
    %v1571 = vperm.slane %v1428, 1
    %v1588 = vunpack.c.l.b16 %v1551
    %v1589 = vunpack.c.l.b16 %v1552
    %v1590 = vunpack.c.l.b16 %v1553
    %v1591 = vunpack.c.l.b16 %v1554
    %v1592 = vunpack.c.l.b16 %v1555
    %v1593 = vunpack.c.l.b16 %v1556
    %v1594 = vunpack.c.l.b16 %v1557
    %v1595 = vunpack.c.l.b16 %v1558
    %v1596 = vunpack.c.l.b16 %v1559
    %v1597 = vunpack.c.l.b16 %v1560
    %v1598 = vunpack.c.l.b16 %v1561
    %v1599 = vunpack.c.l.b16 %v1562
    %v1600 = vunpack.c.l.b16 %v1563
    %v1601 = vunpack.c.l.b16 %v1564
    %v1602 = vunpack.c.l.b16 %v1565
    %v1603 = vunpack.c.l.b16 %v1566
    %v1604 = vpack.c.b16 %v1589, %v1588
    %v1605 = vpack.c.b16 %v1591, %v1590
    %v1606 = vpack.c.b16 %v1593, %v1592
    %v1607 = vpack.c.b16 %v1595, %v1594
    %v1608 = vpack.c.b16 %v1597, %v1596
    %v1609 = vpack.c.b16 %v1599, %v1598
    %v1610 = vpack.c.b16 %v1601, %v1600
    %v1611 = vpack.c.b16 %v1603, %v1602
    %1620 = vmatpush.bf16.msra.mxu0 %v1611
    %1621 = vmatpush.bf16.msra.mxu0 %v1610
    %1622 = vmatpush.bf16.msra.mxu0 %v1609
    %1623 = vmatpush.bf16.msra.mxu0 %v1608
    %1624 = vmatpush.bf16.msra.mxu0 %v1607
    %1625 = vmatpush.bf16.msra.mxu0 %v1606
    %1626 = vmatpush.bf16.msra.mxu0 %v1605
    %1627 = vmatpush.bf16.msra.mxu0 %v1604
    %1628 = vmatmul.bf16.gmra.mxu0 %v1567
    %v1629 = vpop.f32.mrf.mxu0
    %v1630 = vadd.f32 %v1571, %v1629
    %v1631 = vpop.f32.mrf.mxu0
    %v1632 = vadd.f32 %v1571, %v1631
    %1633 = vmatmul.bf16.gmra.mxu0 %v1568
    %v1634 = vpop.f32.mrf.mxu0
    %v1635 = vadd.f32 %v1571, %v1634
    %v1636 = vpop.f32.mrf.mxu0
    %v1637 = vadd.f32 %v1571, %v1636
    %1638 = vmatmul.bf16.gmra.mxu0 %v1569
    %v1639 = vpop.f32.mrf.mxu0
    %v1640 = vadd.f32 %v1571, %v1639
    %v1641 = vpop.f32.mrf.mxu0
    %v1642 = vadd.f32 %v1571, %v1641
    %1643 = vmatmul.bf16.gmra.mxu0 %v1570
    %v1644 = vpop.f32.mrf.mxu0
    %v1645 = vadd.f32 %v1571, %v1644
    %v1646 = vpop.f32.mrf.mxu0
    %v1647 = vadd.f32 %v1571, %v1646
    %1648 = vdwg.mxu0
    %v1649 = vmul.f32 %v1630, 0.01
    %v1650 = vmul.f32 %v1632, 0.01
    %v1651 = vmul.f32 %v1635, 0.01
    %v1652 = vmul.f32 %v1637, 0.01
    %v1653 = vmul.f32 %v1640, 0.01
    %v1654 = vmul.f32 %v1642, 0.01
    %v1655 = vmul.f32 %v1645, 0.01
    %v1656 = vmul.f32 %v1647, 0.01
    %v1657 = vmax.f32 %v1630, %v1649
    %v1658 = vmax.f32 %v1632, %v1650
    %v1659 = vmax.f32 %v1635, %v1651
    %v1660 = vmax.f32 %v1637, %v1652
    %v1661 = vmax.f32 %v1640, %v1653
    %v1662 = vmax.f32 %v1642, %v1654
    %v1663 = vmax.f32 %v1645, %v1655
    %v1664 = vmax.f32 %v1647, %v1656
    %v1665 = vld [vmem:[#allocation5 + $0x80] sm:$0xf]
    %v1666 = vld [vmem:[#allocation5 + $0x84] sm:$0xf]
    %v1667 = vld [vmem:[#allocation5 + $0x88] sm:$0xf]
    %v1668 = vld [vmem:[#allocation5 + $0x8c] sm:$0xf]
    %v1669 = vld [vmem:[#allocation5 + $0x90] sm:$0xf]
    %v1670 = vld [vmem:[#allocation5 + $0x94] sm:$0xf]
    %v1671 = vld [vmem:[#allocation5 + $0x98] sm:$0xf]
    %v1672 = vld [vmem:[#allocation5 + $0x9c] sm:$0xf]
    %v1673 = vld [vmem:[#allocation5 + $0xa0] sm:$0xf]
    %v1674 = vld [vmem:[#allocation5 + $0xa4] sm:$0xf]
    %v1675 = vld [vmem:[#allocation5 + $0xa8] sm:$0xf]
    %v1676 = vld [vmem:[#allocation5 + $0xac] sm:$0xf]
    %v1677 = vld [vmem:[#allocation5 + $0xb0] sm:$0xf]
    %v1678 = vld [vmem:[#allocation5 + $0xb4] sm:$0xf]
    %v1679 = vld [vmem:[#allocation5 + $0xb8] sm:$0xf]
    %v1680 = vld [vmem:[#allocation5 + $0xbc] sm:$0xf]
    %v1681 = vpack.c.bf16 %v1658, %v1657
    %v1682 = vpack.c.bf16 %v1660, %v1659
    %v1683 = vpack.c.bf16 %v1662, %v1661
    %v1684 = vpack.c.bf16 %v1664, %v1663
    %v1685 = vperm.slane %v1428, 2
    %v1702 = vunpack.c.l.b16 %v1665
    %v1703 = vunpack.c.l.b16 %v1666
    %v1704 = vunpack.c.l.b16 %v1667
    %v1705 = vunpack.c.l.b16 %v1668
    %v1706 = vunpack.c.l.b16 %v1669
    %v1707 = vunpack.c.l.b16 %v1670
    %v1708 = vunpack.c.l.b16 %v1671
    %v1709 = vunpack.c.l.b16 %v1672
    %v1710 = vunpack.c.l.b16 %v1673
    %v1711 = vunpack.c.l.b16 %v1674
    %v1712 = vunpack.c.l.b16 %v1675
    %v1713 = vunpack.c.l.b16 %v1676
    %v1714 = vunpack.c.l.b16 %v1677
    %v1715 = vunpack.c.l.b16 %v1678
    %v1716 = vunpack.c.l.b16 %v1679
    %v1717 = vunpack.c.l.b16 %v1680
    %v1718 = vpack.c.b16 %v1703, %v1702
    %v1719 = vpack.c.b16 %v1705, %v1704
    %v1720 = vpack.c.b16 %v1707, %v1706
    %v1721 = vpack.c.b16 %v1709, %v1708
    %v1722 = vpack.c.b16 %v1711, %v1710
    %v1723 = vpack.c.b16 %v1713, %v1712
    %v1724 = vpack.c.b16 %v1715, %v1714
    %v1725 = vpack.c.b16 %v1717, %v1716
    %1734 = vmatpush.bf16.msra.mxu0 %v1725
    %1735 = vmatpush.bf16.msra.mxu0 %v1724
    %1736 = vmatpush.bf16.msra.mxu0 %v1723
    %1737 = vmatpush.bf16.msra.mxu0 %v1722
    %1738 = vmatpush.bf16.msra.mxu0 %v1721
    %1739 = vmatpush.bf16.msra.mxu0 %v1720
    %1740 = vmatpush.bf16.msra.mxu0 %v1719
    %1741 = vmatpush.bf16.msra.mxu0 %v1718
    %1742 = vmatmul.bf16.gmra.mxu0 %v1681
    %v1743 = vpop.f32.mrf.mxu0
    %v1744 = vadd.f32 %v1685, %v1743
    %v1745 = vpop.f32.mrf.mxu0
    %v1746 = vadd.f32 %v1685, %v1745
    %1747 = vmatmul.bf16.gmra.mxu0 %v1682
    %v1748 = vpop.f32.mrf.mxu0
    %v1749 = vadd.f32 %v1685, %v1748
    %v1750 = vpop.f32.mrf.mxu0
    %v1751 = vadd.f32 %v1685, %v1750
    %1752 = vmatmul.bf16.gmra.mxu0 %v1683
    %v1753 = vpop.f32.mrf.mxu0
    %v1754 = vadd.f32 %v1685, %v1753
    %v1755 = vpop.f32.mrf.mxu0
    %v1756 = vadd.f32 %v1685, %v1755
    %1757 = vmatmul.bf16.gmra.mxu0 %v1684
    %v1758 = vpop.f32.mrf.mxu0
    %v1759 = vadd.f32 %v1685, %v1758
    %v1760 = vpop.f32.mrf.mxu0
    %v1761 = vadd.f32 %v1685, %v1760
    %1762 = vdwg.mxu0
    %v1763 = vmul.f32 %v1744, 0.01
    %v1764 = vmul.f32 %v1746, 0.01
    %v1765 = vmul.f32 %v1749, 0.01
    %v1766 = vmul.f32 %v1751, 0.01
    %v1767 = vmul.f32 %v1754, 0.01
    %v1768 = vmul.f32 %v1756, 0.01
    %v1769 = vmul.f32 %v1759, 0.01
    %v1770 = vmul.f32 %v1761, 0.01
    %v1771 = vmax.f32 %v1744, %v1763
    %v1772 = vmax.f32 %v1746, %v1764
    %v1773 = vmax.f32 %v1749, %v1765
    %v1774 = vmax.f32 %v1751, %v1766
    %v1775 = vmax.f32 %v1754, %v1767
    %v1776 = vmax.f32 %v1756, %v1768
    %v1777 = vmax.f32 %v1759, %v1769
    %v1778 = vmax.f32 %v1761, %v1770
    %v1779 = vld [vmem:[#allocation5 + $0xc0] sm:$0xf]
    %v1780 = vld [vmem:[#allocation5 + $0xc4] sm:$0xf]
    %v1781 = vld [vmem:[#allocation5 + $0xc8] sm:$0xf]
    %v1782 = vld [vmem:[#allocation5 + $0xcc] sm:$0xf]
    %v1783 = vld [vmem:[#allocation5 + $0xd0] sm:$0xf]
    %v1784 = vld [vmem:[#allocation5 + $0xd4] sm:$0xf]
    %v1785 = vld [vmem:[#allocation5 + $0xd8] sm:$0xf]
    %v1786 = vld [vmem:[#allocation5 + $0xdc] sm:$0xf]
    %v1787 = vld [vmem:[#allocation5 + $0xe0] sm:$0xf]
    %v1788 = vld [vmem:[#allocation5 + $0xe4] sm:$0xf]
    %v1789 = vld [vmem:[#allocation5 + $0xe8] sm:$0xf]
    %v1790 = vld [vmem:[#allocation5 + $0xec] sm:$0xf]
    %v1791 = vld [vmem:[#allocation5 + $0xf0] sm:$0xf]
    %v1792 = vld [vmem:[#allocation5 + $0xf4] sm:$0xf]
    %v1793 = vld [vmem:[#allocation5 + $0xf8] sm:$0xf]
    %v1794 = vld [vmem:[#allocation5 + $0xfc] sm:$0xf]
    %v1795 = vpack.c.bf16 %v1772, %v1771
    %v1796 = vpack.c.bf16 %v1774, %v1773
    %v1797 = vpack.c.bf16 %v1776, %v1775
    %v1798 = vpack.c.bf16 %v1778, %v1777
    %v1799 = vperm.slane %v1428, 3
    %v1816 = vunpack.c.l.b16 %v1779
    %v1817 = vunpack.c.l.b16 %v1780
    %v1818 = vunpack.c.l.b16 %v1781
    %v1819 = vunpack.c.l.b16 %v1782
    %v1820 = vunpack.c.l.b16 %v1783
    %v1821 = vunpack.c.l.b16 %v1784
    %v1822 = vunpack.c.l.b16 %v1785
    %v1823 = vunpack.c.l.b16 %v1786
    %v1824 = vunpack.c.l.b16 %v1787
    %v1825 = vunpack.c.l.b16 %v1788
    %v1826 = vunpack.c.l.b16 %v1789
    %v1827 = vunpack.c.l.b16 %v1790
    %v1828 = vunpack.c.l.b16 %v1791
    %v1829 = vunpack.c.l.b16 %v1792
    %v1830 = vunpack.c.l.b16 %v1793
    %v1831 = vunpack.c.l.b16 %v1794
    %v1832 = vpack.c.b16 %v1817, %v1816
    %v1833 = vpack.c.b16 %v1819, %v1818
    %v1834 = vpack.c.b16 %v1821, %v1820
    %v1835 = vpack.c.b16 %v1823, %v1822
    %v1836 = vpack.c.b16 %v1825, %v1824
    %v1837 = vpack.c.b16 %v1827, %v1826
    %v1838 = vpack.c.b16 %v1829, %v1828
    %v1839 = vpack.c.b16 %v1831, %v1830
    %1848 = vmatpush.bf16.msra.mxu0 %v1839
    %1849 = vmatpush.bf16.msra.mxu0 %v1838
    %1850 = vmatpush.bf16.msra.mxu0 %v1837
    %1851 = vmatpush.bf16.msra.mxu0 %v1836
    %1852 = vmatpush.bf16.msra.mxu0 %v1835
    %1853 = vmatpush.bf16.msra.mxu0 %v1834
    %1854 = vmatpush.bf16.msra.mxu0 %v1833
    %1855 = vmatpush.bf16.msra.mxu0 %v1832
    %1856 = vmatmul.bf16.gmra.mxu0 %v1795
    %v1857 = vpop.f32.mrf.mxu0
    %v1858 = vadd.f32 %v1799, %v1857
    %v1859 = vpop.f32.mrf.mxu0
    %v1860 = vadd.f32 %v1799, %v1859
    %1861 = vmatmul.bf16.gmra.mxu0 %v1796
    %v1862 = vpop.f32.mrf.mxu0
    %v1863 = vadd.f32 %v1799, %v1862
    %v1864 = vpop.f32.mrf.mxu0
    %v1865 = vadd.f32 %v1799, %v1864
    %1866 = vmatmul.bf16.gmra.mxu0 %v1797
    %v1867 = vpop.f32.mrf.mxu0
    %v1868 = vadd.f32 %v1799, %v1867
    %v1869 = vpop.f32.mrf.mxu0
    %v1870 = vadd.f32 %v1799, %v1869
    %1871 = vmatmul.bf16.gmra.mxu0 %v1798
    %v1872 = vpop.f32.mrf.mxu0
    %v1873 = vadd.f32 %v1799, %v1872
    %v1874 = vpop.f32.mrf.mxu0
    %v1875 = vadd.f32 %v1799, %v1874
    %1876 = vdwg.mxu0
    %v1877 = vmul.f32 %v1858, 0.01
    %v1878 = vmul.f32 %v1860, 0.01
    %v1879 = vmul.f32 %v1863, 0.01
    %v1880 = vmul.f32 %v1865, 0.01
    %v1881 = vmul.f32 %v1868, 0.01
    %v1882 = vmul.f32 %v1870, 0.01
    %v1883 = vmul.f32 %v1873, 0.01
    %v1884 = vmul.f32 %v1875, 0.01
    %v1885 = vmax.f32 %v1858, %v1877
    %v1886 = vmax.f32 %v1860, %v1878
    %v1887 = vmax.f32 %v1863, %v1879
    %v1888 = vmax.f32 %v1865, %v1880
    %v1889 = vmax.f32 %v1868, %v1881
    %v1890 = vmax.f32 %v1870, %v1882
    %v1891 = vmax.f32 %v1873, %v1883
    %v1892 = vmax.f32 %v1875, %v1884
    %v1893 = vld [vmem:[#allocation5 + $0x100] sm:$0xf]
    %v1894 = vld [vmem:[#allocation5 + $0x104] sm:$0xf]
    %v1895 = vld [vmem:[#allocation5 + $0x108] sm:$0xf]
    %v1896 = vld [vmem:[#allocation5 + $0x10c] sm:$0xf]
    %v1897 = vld [vmem:[#allocation5 + $0x110] sm:$0xf]
    %v1898 = vld [vmem:[#allocation5 + $0x114] sm:$0xf]
    %v1899 = vld [vmem:[#allocation5 + $0x118] sm:$0xf]
    %v1900 = vld [vmem:[#allocation5 + $0x11c] sm:$0xf]
    %v1901 = vld [vmem:[#allocation5 + $0x120] sm:$0xf]
    %v1902 = vld [vmem:[#allocation5 + $0x124] sm:$0xf]
    %v1903 = vld [vmem:[#allocation5 + $0x128] sm:$0xf]
    %v1904 = vld [vmem:[#allocation5 + $0x12c] sm:$0xf]
    %v1905 = vld [vmem:[#allocation5 + $0x130] sm:$0xf]
    %v1906 = vld [vmem:[#allocation5 + $0x134] sm:$0xf]
    %v1907 = vld [vmem:[#allocation5 + $0x138] sm:$0xf]
    %v1908 = vld [vmem:[#allocation5 + $0x13c] sm:$0xf]
    %v1909 = vpack.c.bf16 %v1886, %v1885
    %v1910 = vpack.c.bf16 %v1888, %v1887
    %v1911 = vpack.c.bf16 %v1890, %v1889
    %v1912 = vpack.c.bf16 %v1892, %v1891
    %v1913 = vperm.slane %v1428, 4
    %v1930 = vunpack.c.l.b16 %v1893
    %v1931 = vunpack.c.l.b16 %v1894
    %v1932 = vunpack.c.l.b16 %v1895
    %v1933 = vunpack.c.l.b16 %v1896
    %v1934 = vunpack.c.l.b16 %v1897
    %v1935 = vunpack.c.l.b16 %v1898
    %v1936 = vunpack.c.l.b16 %v1899
    %v1937 = vunpack.c.l.b16 %v1900
    %v1938 = vunpack.c.l.b16 %v1901
    %v1939 = vunpack.c.l.b16 %v1902
    %v1940 = vunpack.c.l.b16 %v1903
    %v1941 = vunpack.c.l.b16 %v1904
    %v1942 = vunpack.c.l.b16 %v1905
    %v1943 = vunpack.c.l.b16 %v1906
    %v1944 = vunpack.c.l.b16 %v1907
    %v1945 = vunpack.c.l.b16 %v1908
    %v1946 = vpack.c.b16 %v1931, %v1930
    %v1947 = vpack.c.b16 %v1933, %v1932
    %v1948 = vpack.c.b16 %v1935, %v1934
    %v1949 = vpack.c.b16 %v1937, %v1936
    %v1950 = vpack.c.b16 %v1939, %v1938
    %v1951 = vpack.c.b16 %v1941, %v1940
    %v1952 = vpack.c.b16 %v1943, %v1942
    %v1953 = vpack.c.b16 %v1945, %v1944
    %1962 = vmatpush.bf16.msra.mxu0 %v1953
    %1963 = vmatpush.bf16.msra.mxu0 %v1952
    %1964 = vmatpush.bf16.msra.mxu0 %v1951
    %1965 = vmatpush.bf16.msra.mxu0 %v1950
    %1966 = vmatpush.bf16.msra.mxu0 %v1949
    %1967 = vmatpush.bf16.msra.mxu0 %v1948
    %1968 = vmatpush.bf16.msra.mxu0 %v1947
    %1969 = vmatpush.bf16.msra.mxu0 %v1946
    %1970 = vmatmul.bf16.gmra.mxu0 %v1909
    %v1971 = vpop.f32.mrf.mxu0
    %v1972 = vadd.f32 %v1913, %v1971
    %v1973 = vpop.f32.mrf.mxu0
    %v1974 = vadd.f32 %v1913, %v1973
    %1975 = vmatmul.bf16.gmra.mxu0 %v1910
    %v1976 = vpop.f32.mrf.mxu0
    %v1977 = vadd.f32 %v1913, %v1976
    %v1978 = vpop.f32.mrf.mxu0
    %v1979 = vadd.f32 %v1913, %v1978
    %1980 = vmatmul.bf16.gmra.mxu0 %v1911
    %v1981 = vpop.f32.mrf.mxu0
    %v1982 = vadd.f32 %v1913, %v1981
    %v1983 = vpop.f32.mrf.mxu0
    %v1984 = vadd.f32 %v1913, %v1983
    %1985 = vmatmul.bf16.gmra.mxu0 %v1912
    %v1986 = vpop.f32.mrf.mxu0
    %v1987 = vadd.f32 %v1913, %v1986
    %v1988 = vpop.f32.mrf.mxu0
    %v1989 = vadd.f32 %v1913, %v1988
    %1990 = vdwg.mxu0
    %v1991 = vmul.f32 %v1972, 0.01
    %v1992 = vmul.f32 %v1974, 0.01
    %v1993 = vmul.f32 %v1977, 0.01
    %v1994 = vmul.f32 %v1979, 0.01
    %v1995 = vmul.f32 %v1982, 0.01
    %v1996 = vmul.f32 %v1984, 0.01
    %v1997 = vmul.f32 %v1987, 0.01
    %v1998 = vmul.f32 %v1989, 0.01
    %v1999 = vmax.f32 %v1972, %v1991
    %v2000 = vmax.f32 %v1974, %v1992
    %v2001 = vmax.f32 %v1977, %v1993
    %v2002 = vmax.f32 %v1979, %v1994
    %v2003 = vmax.f32 %v1982, %v1995
    %v2004 = vmax.f32 %v1984, %v1996
    %v2005 = vmax.f32 %v1987, %v1997
    %v2006 = vmax.f32 %v1989, %v1998
    %v2007 = vld [vmem:[#allocation5 + $0x140] sm:$0xf]
    %v2008 = vld [vmem:[#allocation5 + $0x144] sm:$0xf]
    %v2009 = vld [vmem:[#allocation5 + $0x148] sm:$0xf]
    %v2010 = vld [vmem:[#allocation5 + $0x14c] sm:$0xf]
    %v2011 = vld [vmem:[#allocation5 + $0x150] sm:$0xf]
    %v2012 = vld [vmem:[#allocation5 + $0x154] sm:$0xf]
    %v2013 = vld [vmem:[#allocation5 + $0x158] sm:$0xf]
    %v2014 = vld [vmem:[#allocation5 + $0x15c] sm:$0xf]
    %v2015 = vld [vmem:[#allocation5 + $0x160] sm:$0xf]
    %v2016 = vld [vmem:[#allocation5 + $0x164] sm:$0xf]
    %v2017 = vld [vmem:[#allocation5 + $0x168] sm:$0xf]
    %v2018 = vld [vmem:[#allocation5 + $0x16c] sm:$0xf]
    %v2019 = vld [vmem:[#allocation5 + $0x170] sm:$0xf]
    %v2020 = vld [vmem:[#allocation5 + $0x174] sm:$0xf]
    %v2021 = vld [vmem:[#allocation5 + $0x178] sm:$0xf]
    %v2022 = vld [vmem:[#allocation5 + $0x17c] sm:$0xf]
    %v2023 = vpack.c.bf16 %v2000, %v1999
    %v2024 = vpack.c.bf16 %v2002, %v2001
    %v2025 = vpack.c.bf16 %v2004, %v2003
    %v2026 = vpack.c.bf16 %v2006, %v2005
    %v2027 = vperm.slane %v1428, 5
    %v2044 = vunpack.c.l.b16 %v2007
    %v2045 = vunpack.c.l.b16 %v2008
    %v2046 = vunpack.c.l.b16 %v2009
    %v2047 = vunpack.c.l.b16 %v2010
    %v2048 = vunpack.c.l.b16 %v2011
    %v2049 = vunpack.c.l.b16 %v2012
    %v2050 = vunpack.c.l.b16 %v2013
    %v2051 = vunpack.c.l.b16 %v2014
    %v2052 = vunpack.c.l.b16 %v2015
    %v2053 = vunpack.c.l.b16 %v2016
    %v2054 = vunpack.c.l.b16 %v2017
    %v2055 = vunpack.c.l.b16 %v2018
    %v2056 = vunpack.c.l.b16 %v2019
    %v2057 = vunpack.c.l.b16 %v2020
    %v2058 = vunpack.c.l.b16 %v2021
    %v2059 = vunpack.c.l.b16 %v2022
    %v2060 = vpack.c.b16 %v2045, %v2044
    %v2061 = vpack.c.b16 %v2047, %v2046
    %v2062 = vpack.c.b16 %v2049, %v2048
    %v2063 = vpack.c.b16 %v2051, %v2050
    %v2064 = vpack.c.b16 %v2053, %v2052
    %v2065 = vpack.c.b16 %v2055, %v2054
    %v2066 = vpack.c.b16 %v2057, %v2056
    %v2067 = vpack.c.b16 %v2059, %v2058
    %2076 = vmatpush.bf16.msra.mxu0 %v2067
    %2077 = vmatpush.bf16.msra.mxu0 %v2066
    %2078 = vmatpush.bf16.msra.mxu0 %v2065
    %2079 = vmatpush.bf16.msra.mxu0 %v2064
    %2080 = vmatpush.bf16.msra.mxu0 %v2063
    %2081 = vmatpush.bf16.msra.mxu0 %v2062
    %2082 = vmatpush.bf16.msra.mxu0 %v2061
    %2083 = vmatpush.bf16.msra.mxu0 %v2060
    %2084 = vmatmul.bf16.gmra.mxu0 %v2023
    %v2085 = vpop.f32.mrf.mxu0
    %v2086 = vadd.f32 %v2027, %v2085
    %v2087 = vpop.f32.mrf.mxu0
    %v2088 = vadd.f32 %v2027, %v2087
    %2089 = vmatmul.bf16.gmra.mxu0 %v2024
    %v2090 = vpop.f32.mrf.mxu0
    %v2091 = vadd.f32 %v2027, %v2090
    %v2092 = vpop.f32.mrf.mxu0
    %v2093 = vadd.f32 %v2027, %v2092
    %2094 = vmatmul.bf16.gmra.mxu0 %v2025
    %v2095 = vpop.f32.mrf.mxu0
    %v2096 = vadd.f32 %v2027, %v2095
    %v2097 = vpop.f32.mrf.mxu0
    %v2098 = vadd.f32 %v2027, %v2097
    %2099 = vmatmul.bf16.gmra.mxu0 %v2026
    %v2100 = vpop.f32.mrf.mxu0
    %v2101 = vadd.f32 %v2027, %v2100
    %v2102 = vpop.f32.mrf.mxu0
    %v2103 = vadd.f32 %v2027, %v2102
    %2104 = vdwg.mxu0
    %v2105 = vmul.f32 %v2086, 0.01
    %v2106 = vmul.f32 %v2088, 0.01
    %v2107 = vmul.f32 %v2091, 0.01
    %v2108 = vmul.f32 %v2093, 0.01
    %v2109 = vmul.f32 %v2096, 0.01
    %v2110 = vmul.f32 %v2098, 0.01
    %v2111 = vmul.f32 %v2101, 0.01
    %v2112 = vmul.f32 %v2103, 0.01
    %v2113 = vmax.f32 %v2086, %v2105
    %v2114 = vmax.f32 %v2088, %v2106
    %v2115 = vmax.f32 %v2091, %v2107
    %v2116 = vmax.f32 %v2093, %v2108
    %v2117 = vmax.f32 %v2096, %v2109
    %v2118 = vmax.f32 %v2098, %v2110
    %v2119 = vmax.f32 %v2101, %v2111
    %v2120 = vmax.f32 %v2103, %v2112
    %v2121 = vld [vmem:[#allocation5 + $0x180] sm:$0xf]
    %v2122 = vld [vmem:[#allocation5 + $0x184] sm:$0xf]
    %v2123 = vld [vmem:[#allocation5 + $0x188] sm:$0xf]
    %v2124 = vld [vmem:[#allocation5 + $0x18c] sm:$0xf]
    %v2125 = vld [vmem:[#allocation5 + $0x190] sm:$0xf]
    %v2126 = vld [vmem:[#allocation5 + $0x194] sm:$0xf]
    %v2127 = vld [vmem:[#allocation5 + $0x198] sm:$0xf]
    %v2128 = vld [vmem:[#allocation5 + $0x19c] sm:$0xf]
    %v2129 = vld [vmem:[#allocation5 + $0x1a0] sm:$0xf]
    %v2130 = vld [vmem:[#allocation5 + $0x1a4] sm:$0xf]
    %v2131 = vld [vmem:[#allocation5 + $0x1a8] sm:$0xf]
    %v2132 = vld [vmem:[#allocation5 + $0x1ac] sm:$0xf]
    %v2133 = vld [vmem:[#allocation5 + $0x1b0] sm:$0xf]
    %v2134 = vld [vmem:[#allocation5 + $0x1b4] sm:$0xf]
    %v2135 = vld [vmem:[#allocation5 + $0x1b8] sm:$0xf]
    %v2136 = vld [vmem:[#allocation5 + $0x1bc] sm:$0xf]
    %v2137 = vpack.c.bf16 %v2114, %v2113
    %v2138 = vpack.c.bf16 %v2116, %v2115
    %v2139 = vpack.c.bf16 %v2118, %v2117
    %v2140 = vpack.c.bf16 %v2120, %v2119
    %v2141 = vperm.slane %v1428, 6
    %v2158 = vunpack.c.l.b16 %v2121
    %v2159 = vunpack.c.l.b16 %v2122
    %v2160 = vunpack.c.l.b16 %v2123
    %v2161 = vunpack.c.l.b16 %v2124
    %v2162 = vunpack.c.l.b16 %v2125
    %v2163 = vunpack.c.l.b16 %v2126
    %v2164 = vunpack.c.l.b16 %v2127
    %v2165 = vunpack.c.l.b16 %v2128
    %v2166 = vunpack.c.l.b16 %v2129
    %v2167 = vunpack.c.l.b16 %v2130
    %v2168 = vunpack.c.l.b16 %v2131
    %v2169 = vunpack.c.l.b16 %v2132
    %v2170 = vunpack.c.l.b16 %v2133
    %v2171 = vunpack.c.l.b16 %v2134
    %v2172 = vunpack.c.l.b16 %v2135
    %v2173 = vunpack.c.l.b16 %v2136
    %v2174 = vpack.c.b16 %v2159, %v2158
    %v2175 = vpack.c.b16 %v2161, %v2160
    %v2176 = vpack.c.b16 %v2163, %v2162
    %v2177 = vpack.c.b16 %v2165, %v2164
    %v2178 = vpack.c.b16 %v2167, %v2166
    %v2179 = vpack.c.b16 %v2169, %v2168
    %v2180 = vpack.c.b16 %v2171, %v2170
    %v2181 = vpack.c.b16 %v2173, %v2172
    %2190 = vmatpush.bf16.msra.mxu0 %v2181
    %2191 = vmatpush.bf16.msra.mxu0 %v2180
    %2192 = vmatpush.bf16.msra.mxu0 %v2179
    %2193 = vmatpush.bf16.msra.mxu0 %v2178
    %2194 = vmatpush.bf16.msra.mxu0 %v2177
    %2195 = vmatpush.bf16.msra.mxu0 %v2176
    %2196 = vmatpush.bf16.msra.mxu0 %v2175
    %2197 = vmatpush.bf16.msra.mxu0 %v2174
    %2198 = vmatmul.bf16.gmra.mxu0 %v2137
    %v2199 = vpop.f32.mrf.mxu0
    %v2200 = vadd.f32 %v2141, %v2199
    %v2201 = vpop.f32.mrf.mxu0
    %v2202 = vadd.f32 %v2141, %v2201
    %2203 = vmatmul.bf16.gmra.mxu0 %v2138
    %v2204 = vpop.f32.mrf.mxu0
    %v2205 = vadd.f32 %v2141, %v2204
    %v2206 = vpop.f32.mrf.mxu0
    %v2207 = vadd.f32 %v2141, %v2206
    %2208 = vmatmul.bf16.gmra.mxu0 %v2139
    %v2209 = vpop.f32.mrf.mxu0
    %v2210 = vadd.f32 %v2141, %v2209
    %v2211 = vpop.f32.mrf.mxu0
    %v2212 = vadd.f32 %v2141, %v2211
    %2213 = vmatmul.bf16.gmra.mxu0 %v2140
    %v2214 = vpop.f32.mrf.mxu0
    %v2215 = vadd.f32 %v2141, %v2214
    %v2216 = vpop.f32.mrf.mxu0
    %v2217 = vadd.f32 %v2141, %v2216
    %2218 = vdwg.mxu0
    %v2219 = vmul.f32 %v2200, 0.5
    %v2220 = vmul.f32 %v2202, 0.5
    %v2221 = vmul.f32 %v2205, 0.5
    %v2222 = vmul.f32 %v2207, 0.5
    %v2223 = vmul.f32 %v2210, 0.5
    %v2224 = vmul.f32 %v2212, 0.5
    %v2225 = vmul.f32 %v2215, 0.5
    %v2226 = vmul.f32 %v2217, 0.5
    %v2227 = vtanh.pop %v2219
    %v2228 = vtanh.pop %v2220
    %v2229 = vtanh.pop %v2221
    %v2230 = vtanh.pop %v2222
    %v2231 = vtanh.pop %v2223
    %v2232 = vtanh.pop %v2224
    %v2233 = vtanh.pop %v2225
    %v2234 = vtanh.pop %v2226
    %v2235 = vadd.f32 %v2227, 1.0
    %v2236 = vadd.f32 %v2228, 1.0
    %v2237 = vadd.f32 %v2229, 1.0
    %v2238 = vadd.f32 %v2230, 1.0
    %v2239 = vadd.f32 %v2231, 1.0
    %v2240 = vadd.f32 %v2232, 1.0
    %v2241 = vadd.f32 %v2233, 1.0
    %v2242 = vadd.f32 %v2234, 1.0
    %v2243 = vmul.f32 %v2235, 0.5
    %v2244 = vmul.f32 %v2236, 0.5
    %v2245 = vmul.f32 %v2237, 0.5
    %v2246 = vmul.f32 %v2238, 0.5
    %v2247 = vmul.f32 %v2239, 0.5
    %v2248 = vmul.f32 %v2240, 0.5
    %v2249 = vmul.f32 %v2241, 0.5
    %v2250 = vmul.f32 %v2242, 0.5
    %2251 = vst [vmem:[%s4] sm:$0xff] %v2243
    %2252 = vst [vmem:[%s4 + $0x8] sm:$0xff] %v2244
    %2253 = vst [vmem:[%s4 + $0x10] sm:$0xff] %v2245
    %2254 = vst [vmem:[%s4 + $0x18] sm:$0xff] %v2246
    %2255 = vst [vmem:[%s4 + $0x20] sm:$0xff] %v2247
    %2256 = vst [vmem:[%s4 + $0x28] sm:$0xff] %v2248
    %2257 = vst [vmem:[%s4 + $0x30] sm:$0xff] %v2249
    %2258 = vst [vmem:[%s4 + $0x38] sm:$0xff] %v2250
    // Predicated region
    $region26: #{single_event_forward.1} parent=1 // pred_check
      _
    $region27: #{single_event_forward.1} parent=1 // pred_check_branch
      %2260 = sbr.rel (0) target = $region29
    $region28: #{single_event_forward.1} parent=1 // pred_region
      _
    $region29: #{single_event_forward.1} parent=1 // pred_fallthru
      _
    // Predicated region
    $region30: #{single_event_forward.1} parent=1 // pred_check
      _
    $region31: #{single_event_forward.1} parent=1 // pred_check_branch
      %2262 = sbr.rel (0) target = $region33
    $region32: #{single_event_forward.1} parent=1 // pred_region
      _
    $region33: #{single_event_forward.1} parent=1 // pred_fallthru
      _
    // Predicated region
    $region34: #{single_event_forward.1} parent=1 // pred_check
      _
    $region35: #{single_event_forward.1} parent=1 // pred_check_branch
      %2264 = sbr.rel (0) target = $region37
    $region36: #{single_event_forward.1} parent=1 // pred_region
      _
    $region37: #{single_event_forward.1} parent=1 // pred_fallthru
      _
    // Predicated region
    $region38: #{single_event_forward.1} parent=1 // pred_check
      _
    $region39: #{single_event_forward.1} parent=1 // pred_check_branch
      %2266 = sbr.rel (0) target = $region41
    $region40: #{single_event_forward.1} parent=1 // pred_region
      _
    $region41: #{single_event_forward.1} parent=1 // pred_fallthru
      _
    %2267 = vsyncpa [#allocation4], 1
    %2268 = vsyncpa [#allocation6], 1

</llo_original>
